<compile_context>
chip_gen: v7x
topology: tpu7x:2x2x1
jax: 0.10.0
libtpu: 0.0.40
codegen_flags: <defaults>
</compile_context>

<pallas_src>
import functools

import jax
import jax.numpy as jnp
from jax import lax
from jax.experimental import pallas as pl
from jax.experimental.pallas import tpu as pltpu

C_IN = 24
C_OUT = 144
BN_EPS = 1e-3


def _fused_kernel(x41_ref, x32_ref, w_ref, gamma_ref, beta_ref,
                  o_ref, sum_ref, sumsq_ref, scale_ref, shift_ref,
                  *, hw, tile, inv_rows, needs_mask):
    # x41_ref / x32_ref : (C_IN, T)     current spatial tile of one image
    # w_ref             : (C_OUT, C_IN) 1x1 conv weight
    # gamma_ref/beta_ref: (C_OUT, 1)
    # o_ref             : (C_OUT, T)
    # scratch           : four (C_OUT, 1) f32 accumulators / folded BN params
    p = pl.program_id(0)   # 0 = stats pass, 1 = normalize pass
    b = pl.program_id(1)   # batch element
    t = pl.program_id(2)   # spatial tile

    x = x41_ref[...] + x32_ref[...]                       # fused add (VPU)
    if needs_mask:
        # Boundary tile: zero out-of-range lanes so the stats reduction is exact.
        rem = hw - t * tile
        lane = lax.broadcasted_iota(jnp.int32, x.shape, 1)
        x = jnp.where(lane < rem, x, 0.0)

    # 1x1 conv == matmul, spatial on the lane axis (MXU).
    y = jnp.dot(w_ref[...], x, preferred_element_type=jnp.float32)  # (C_OUT, T)

    @pl.when(p == 0)
    def _stats_pass():
        @pl.when((b == 0) & (t == 0))
        def _init():
            sum_ref[...] = jnp.zeros_like(sum_ref)
            sumsq_ref[...] = jnp.zeros_like(sumsq_ref)

        sum_ref[...] += jnp.sum(y, axis=1, keepdims=True)
        sumsq_ref[...] += jnp.sum(y * y, axis=1, keepdims=True)

    @pl.when(p == 1)
    def _normalize_pass():
        @pl.when((b == 0) & (t == 0))
        def _fold_bn():
            mean = sum_ref[...] * inv_rows
            var = jnp.maximum(sumsq_ref[...] * inv_rows - mean * mean, 0.0)
            scale = gamma_ref[...] * lax.rsqrt(var + BN_EPS)
            scale_ref[...] = scale
            shift_ref[...] = beta_ref[...] - mean * scale

        o_ref[...] = y * scale_ref[...] + shift_ref[...]


def _pick_tile(hw, target=2048):
    """Spatial (lane) tile: full extent if small, else a multiple of 128."""
    if hw <= target:
        return hw
    return (target // 128) * 128


def fused_add_conv_bn(x41_nchw, x32_nchw, w_oihw, gamma, beta):
    """x*_nchw: (N, 24, H, W) f32; w_oihw: (144, 24, 1, 1); gamma/beta: (144,)."""
    n, c, h, w = x41_nchw.shape
    assert c == C_IN and w_oihw.shape == (C_OUT, C_IN, 1, 1)
    hw = h * w
    rows = n * hw

    # Pure reshapes (no transpose): NCHW -> (N, C, H*W).
    x41_r = x41_nchw.reshape(n, C_IN, hw)
    x32_r = x32_nchw.reshape(n, C_IN, hw)
    w_mat = w_oihw.reshape(C_OUT, C_IN)
    gamma2 = gamma.reshape(C_OUT, 1)
    beta2 = beta.reshape(C_OUT, 1)

    tile = _pick_tile(hw)
    n_tiles = pl.cdiv(hw, tile)
    needs_mask = (hw % tile) != 0

    kernel = functools.partial(
        _fused_kernel,
        hw=hw, tile=tile, inv_rows=1.0 / rows, needs_mask=needs_mask)

    out = pl.pallas_call(
        kernel,
        out_shape=jax.ShapeDtypeStruct((n, C_OUT, hw), jnp.float32),
        grid_spec=pltpu.PrefetchScalarGridSpec(
            num_scalar_prefetch=0,
            grid=(2, n, n_tiles),                       # (pass, batch, spatial tile)
            in_specs=[
                pl.BlockSpec((None, C_IN, tile), lambda p, b, t: (b, 0, t)),
                pl.BlockSpec((None, C_IN, tile), lambda p, b, t: (b, 0, t)),
                pl.BlockSpec((C_OUT, C_IN), lambda p, b, t: (0, 0)),
                pl.BlockSpec((C_OUT, 1), lambda p, b, t: (0, 0)),
                pl.BlockSpec((C_OUT, 1), lambda p, b, t: (0, 0)),
            ],
            # During the stats pass (p==0) the output block index is pinned to
            # (0,0,0) so no garbage blocks are ever written back; every block
            # is written exactly once during the normalize pass (p==1).
            out_specs=pl.BlockSpec((None, C_OUT, tile),
                                   lambda p, b, t: (b * p, 0, t * p)),
            scratch_shapes=[pltpu.VMEM((C_OUT, 1), jnp.float32)] * 4,
        ),
        compiler_params=pltpu.CompilerParams(
            dimension_semantics=("arbitrary", "arbitrary", "arbitrary")),
    )(x41_r, x32_r, w_mat, gamma2, beta2)

    return out.reshape(n, C_OUT, h, w)


def _reference(x41, x32, w_oihw, gamma, beta):
    """Pure-JAX reference with the same semantics (for verification)."""
    x = x41 + x32
    w_mat = w_oihw.reshape(C_OUT, C_IN)
    y = jnp.einsum('nchw,oc->nohw', x, w_mat)
    mean = jnp.mean(y, axis=(0, 2, 3), keepdims=True)
    var = jnp.mean((y - mean) ** 2, axis=(0, 2, 3), keepdims=True)
    return (y - mean) / jnp.sqrt(var + BN_EPS) * gamma.reshape(1, -1, 1, 1) \
        + beta.reshape(1, -1, 1, 1)


if __name__ == "__main__":
    key = jax.random.PRNGKey(0)
    k1, k2, k3, k4, k5 = jax.random.split(key, 5)

    # Small shapes consistent with the module (channels fixed by the conv 24 -> 144).
    N, H, W = 2, 16, 16
    x41 = jax.random.normal(k1, (N, C_IN, H, W), jnp.float32)
    x32 = jax.random.normal(k2, (N, C_IN, H, W), jnp.float32)

    w_conv = 0.1 * jax.random.normal(k3, (C_OUT, C_IN, 1, 1), jnp.float32)
    gamma = 1.0 + 0.1 * jax.random.normal(k4, (C_OUT,), jnp.float32)
    beta = 0.1 * jax.random.normal(k5, (C_OUT,), jnp.float32)

    out = fused_add_conv_bn(x41, x32, w_conv, gamma, beta)
    out = jax.block_until_ready(out)

    ref = _reference(x41, x32, w_conv, gamma, beta)
    assert out.shape == (N, C_OUT, H, W)
    assert jnp.max(jnp.abs(out - ref)) < 1e-3, "mismatch vs JAX reference"

    print("KERNEL_OK")
</pallas_src>

<mosaic_0001>
module attributes {stable_mosaic.version = 11 : i64} {
  func.func @_fused_kernel(%arg0: i32, %arg1: i32, %arg2: i32, %arg3: memref<1x24x256xf32, #tpu.memory_space<vmem>>, %arg4: memref<1x24x256xf32, #tpu.memory_space<vmem>>, %arg5: memref<144x24xf32, #tpu.memory_space<vmem>>, %arg6: memref<144x1xf32, #tpu.memory_space<vmem>>, %arg7: memref<144x1xf32, #tpu.memory_space<vmem>>, %arg8: memref<1x144x256xf32, #tpu.memory_space<vmem>>, %arg9: memref<144x1xf32, #tpu.memory_space<vmem>>, %arg10: memref<144x1xf32, #tpu.memory_space<vmem>>, %arg11: memref<144x1xf32, #tpu.memory_space<vmem>>, %arg12: memref<144x1xf32, #tpu.memory_space<vmem>>) attributes {dimension_semantics = [#tpu.dimension_semantics<arbitrary>, #tpu.dimension_semantics<arbitrary>, #tpu.dimension_semantics<arbitrary>], iteration_bounds = array<i64: 2, 2, 1>, scalar_prefetch = 0 : i64, scratch_operands = 4 : i64, tpu.core_type = #tpu.core_type<tc>, window_params = [{transform_indices = @transform_0, window_bounds = array<i64: 1, 24, 256>}, {transform_indices = @transform_1, window_bounds = array<i64: 1, 24, 256>}, {pipeline_mode = #tpu.pipeline_mode<synchronous>, transform_indices = @transform_2, window_bounds = array<i64: 144, 24>}, {pipeline_mode = #tpu.pipeline_mode<synchronous>, transform_indices = @transform_3, window_bounds = array<i64: 144, 1>}, {pipeline_mode = #tpu.pipeline_mode<synchronous>, transform_indices = @transform_4, window_bounds = array<i64: 144, 1>}, {transform_indices = @transform_5, window_bounds = array<i64: 1, 144, 256>}]} {
    %c0 = arith.constant 0 : index
    %c0_0 = arith.constant 0 : index
    %c0_1 = arith.constant 0 : index
    %0 = vector.load %arg3[%c0, %c0_0, %c0_1] : memref<1x24x256xf32, #tpu.memory_space<vmem>>, vector<1x24x256xf32>
    %1 = vector.shape_cast %0 : vector<1x24x256xf32> to vector<24x256xf32>
    %c0_2 = arith.constant 0 : index
    %c0_3 = arith.constant 0 : index
    %c0_4 = arith.constant 0 : index
    %2 = vector.load %arg4[%c0_2, %c0_3, %c0_4] : memref<1x24x256xf32, #tpu.memory_space<vmem>>, vector<1x24x256xf32>
    %3 = vector.shape_cast %2 : vector<1x24x256xf32> to vector<24x256xf32>
    %4 = arith.addf %1, %3 : vector<24x256xf32>
    %c0_5 = arith.constant 0 : index
    %c0_6 = arith.constant 0 : index
    %5 = vector.load %arg5[%c0_5, %c0_6] : memref<144x24xf32, #tpu.memory_space<vmem>>, vector<144x24xf32>
    %cst = arith.constant dense<0.000000e+00> : vector<144x256xf32>
    %6 = tpu.matmul %5, %4, %cst {dimension_numbers = #tpu.dot_dimension_numbers<[1], [0], [0], [1], [0, 0, 1, 1], [], []>} : vector<144x24xf32>, vector<24x256xf32>, vector<144x256xf32> -> vector<144x256xf32>
    %c0_i32 = arith.constant 0 : i32
    %7 = arith.cmpi eq, %arg0, %c0_i32 : i32
    %8 = arith.extui %7 : i1 to i32
    %c0_i32_7 = arith.constant 0 : i32
    %9 = arith.cmpi ne, %8, %c0_i32_7 : i32
    scf.if %9 {
      %c0_i32_9 = arith.constant 0 : i32
      %13 = arith.cmpi eq, %arg1, %c0_i32_9 : i32
      %c0_i32_10 = arith.constant 0 : i32
      %14 = arith.cmpi eq, %arg2, %c0_i32_10 : i32
      %15 = arith.andi %13, %14 : i1
      %16 = arith.extui %15 : i1 to i32
      %c0_i32_11 = arith.constant 0 : i32
      %17 = arith.cmpi ne, %16, %c0_i32_11 : i32
      scf.if %17 {
        %cst_22 = arith.constant 0.000000e+00 : f32
        %29 = vector.broadcast %cst_22 : f32 to vector<144x1xf32>
        %c0_23 = arith.constant 0 : index
        %c0_24 = arith.constant 0 : index
        %30 = vector.load %arg9[%c0_23, %c0_24] : memref<144x1xf32, #tpu.memory_space<vmem>>, vector<144x1xf32>
        tpu.vector_store %arg9[%c0_23, %c0_24], %29 {strides = array<i32>} : memref<144x1xf32, #tpu.memory_space<vmem>>, vector<144x1xf32>,
        %cst_25 = arith.constant 0.000000e+00 : f32
        %31 = vector.broadcast %cst_25 : f32 to vector<144x1xf32>
        %c0_26 = arith.constant 0 : index
        %c0_27 = arith.constant 0 : index
        %32 = vector.load %arg10[%c0_26, %c0_27] : memref<144x1xf32, #tpu.memory_space<vmem>>, vector<144x1xf32>
        tpu.vector_store %arg10[%c0_26, %c0_27], %31 {strides = array<i32>} : memref<144x1xf32, #tpu.memory_space<vmem>>, vector<144x1xf32>,
      } else {
      }
      %c0_12 = arith.constant 0 : index
      %c0_13 = arith.constant 0 : index
      %18 = vector.load %arg9[%c0_12, %c0_13] : memref<144x1xf32, #tpu.memory_space<vmem>>, vector<144x1xf32>
      %cst_14 = arith.constant dense<0.000000e+00> : vector<144xf32>
      %19 = vector.multi_reduction <add>, %6, %cst_14 [1] : vector<144x256xf32> to vector<144xf32>
      %20 = vector.shape_cast %19 : vector<144xf32> to vector<144x1xf32>
      %21 = arith.addf %18, %20 : vector<144x1xf32>
      %c0_15 = arith.constant 0 : index
      %c0_16 = arith.constant 0 : index
      %22 = vector.load %arg9[%c0_15, %c0_16] : memref<144x1xf32, #tpu.memory_space<vmem>>, vector<144x1xf32>
      tpu.vector_store %arg9[%c0_15, %c0_16], %21 {strides = array<i32>} : memref<144x1xf32, #tpu.memory_space<vmem>>, vector<144x1xf32>,
      %c0_17 = arith.constant 0 : index
      %c0_18 = arith.constant 0 : index
      %23 = vector.load %arg10[%c0_17, %c0_18] : memref<144x1xf32, #tpu.memory_space<vmem>>, vector<144x1xf32>
      %24 = arith.mulf %6, %6 : vector<144x256xf32>
      %cst_19 = arith.constant dense<0.000000e+00> : vector<144xf32>
      %25 = vector.multi_reduction <add>, %24, %cst_19 [1] : vector<144x256xf32> to vector<144xf32>
      %26 = vector.shape_cast %25 : vector<144xf32> to vector<144x1xf32>
      %27 = arith.addf %23, %26 : vector<144x1xf32>
      %c0_20 = arith.constant 0 : index
      %c0_21 = arith.constant 0 : index
      %28 = vector.load %arg10[%c0_20, %c0_21] : memref<144x1xf32, #tpu.memory_space<vmem>>, vector<144x1xf32>
      tpu.vector_store %arg10[%c0_20, %c0_21], %27 {strides = array<i32>} : memref<144x1xf32, #tpu.memory_space<vmem>>, vector<144x1xf32>,
    } else {
    }
    %c1_i32 = arith.constant 1 : i32
    %10 = arith.cmpi eq, %arg0, %c1_i32 : i32
    %11 = arith.extui %10 : i1 to i32
    %c0_i32_8 = arith.constant 0 : i32
    %12 = arith.cmpi ne, %11, %c0_i32_8 : i32
    scf.if %12 {
      %c0_i32_9 = arith.constant 0 : i32
      %13 = arith.cmpi eq, %arg1, %c0_i32_9 : i32
      %c0_i32_10 = arith.constant 0 : i32
      %14 = arith.cmpi eq, %arg2, %c0_i32_10 : i32
      %15 = arith.andi %13, %14 : i1
      %16 = arith.extui %15 : i1 to i32
      %c0_i32_11 = arith.constant 0 : i32
      %17 = arith.cmpi ne, %16, %c0_i32_11 : i32
      scf.if %17 {
        %c0_19 = arith.constant 0 : index
        %c0_20 = arith.constant 0 : index
        %27 = vector.load %arg9[%c0_19, %c0_20] : memref<144x1xf32, #tpu.memory_space<vmem>>, vector<144x1xf32>
        %cst_21 = arith.constant 0.001953125 : f32
        %28 = vector.broadcast %cst_21 : f32 to vector<144x1xf32>
        %29 = arith.mulf %27, %28 : vector<144x1xf32>
        %c0_22 = arith.constant 0 : index
        %c0_23 = arith.constant 0 : index
        %30 = vector.load %arg10[%c0_22, %c0_23] : memref<144x1xf32, #tpu.memory_space<vmem>>, vector<144x1xf32>
        %cst_24 = arith.constant 0.001953125 : f32
        %31 = vector.broadcast %cst_24 : f32 to vector<144x1xf32>
        %32 = arith.mulf %30, %31 : vector<144x1xf32>
        %33 = arith.mulf %29, %29 : vector<144x1xf32>
        %34 = arith.subf %32, %33 : vector<144x1xf32>
        %cst_25 = arith.constant 0.000000e+00 : f32
        %35 = vector.broadcast %cst_25 : f32 to vector<144x1xf32>
        %36 = arith.maximumf %34, %35 : vector<144x1xf32>
        %c0_26 = arith.constant 0 : index
        %c0_27 = arith.constant 0 : index
        %37 = vector.load %arg6[%c0_26, %c0_27] : memref<144x1xf32, #tpu.memory_space<vmem>>, vector<144x1xf32>
        %cst_28 = arith.constant 1.000000e-03 : f32
        %38 = vector.broadcast %cst_28 : f32 to vector<144x1xf32>
        %39 = arith.addf %36, %38 : vector<144x1xf32>
        %40 = math.rsqrt %39 : vector<144x1xf32>
        %41 = arith.mulf %37, %40 : vector<144x1xf32>
        %c0_29 = arith.constant 0 : index
        %c0_30 = arith.constant 0 : index
        %42 = vector.load %arg11[%c0_29, %c0_30] : memref<144x1xf32, #tpu.memory_space<vmem>>, vector<144x1xf32>
        tpu.vector_store %arg11[%c0_29, %c0_30], %41 {strides = array<i32>} : memref<144x1xf32, #tpu.memory_space<vmem>>, vector<144x1xf32>,
        %c0_31 = arith.constant 0 : index
        %c0_32 = arith.constant 0 : index
        %43 = vector.load %arg7[%c0_31, %c0_32] : memref<144x1xf32, #tpu.memory_space<vmem>>, vector<144x1xf32>
        %44 = arith.mulf %29, %41 : vector<144x1xf32>
        %45 = arith.subf %43, %44 : vector<144x1xf32>
        %c0_33 = arith.constant 0 : index
        %c0_34 = arith.constant 0 : index
        %46 = vector.load %arg12[%c0_33, %c0_34] : memref<144x1xf32, #tpu.memory_space<vmem>>, vector<144x1xf32>
        tpu.vector_store %arg12[%c0_33, %c0_34], %45 {strides = array<i32>} : memref<144x1xf32, #tpu.memory_space<vmem>>, vector<144x1xf32>,
      } else {
      }
      %c0_12 = arith.constant 0 : index
      %c0_13 = arith.constant 0 : index
      %18 = vector.load %arg11[%c0_12, %c0_13] : memref<144x1xf32, #tpu.memory_space<vmem>>, vector<144x1xf32>
      %19 = vector.broadcast %18 : vector<144x1xf32> to vector<144x256xf32>
      %20 = arith.mulf %6, %19 : vector<144x256xf32>
      %c0_14 = arith.constant 0 : index
      %c0_15 = arith.constant 0 : index
      %21 = vector.load %arg12[%c0_14, %c0_15] : memref<144x1xf32, #tpu.memory_space<vmem>>, vector<144x1xf32>
      %22 = vector.broadcast %21 : vector<144x1xf32> to vector<144x256xf32>
      %23 = arith.addf %20, %22 : vector<144x256xf32>
      %c0_16 = arith.constant 0 : index
      %c0_17 = arith.constant 0 : index
      %c0_18 = arith.constant 0 : index
      %24 = vector.load %arg8[%c0_16, %c0_17, %c0_18] : memref<1x144x256xf32, #tpu.memory_space<vmem>>, vector<1x144x256xf32>
      %25 = vector.shape_cast %24 : vector<1x144x256xf32> to vector<144x256xf32>
      %26 = vector.shape_cast %23 : vector<144x256xf32> to vector<1x144x256xf32>
      tpu.vector_store %arg8[%c0_16, %c0_17, %c0_18], %26 {strides = array<i32>} : memref<1x144x256xf32, #tpu.memory_space<vmem>>, vector<1x144x256xf32>,
    } else {
    }
    return
  }
  func.func @transform_0(%arg0: i32, %arg1: i32, %arg2: i32) -> (i32, i32, i32) {
    %c0_i32 = arith.constant 0 : i32
    %c0_i32_0 = arith.constant 0 : i32
    return %arg1, %c0_i32, %arg2 : i32, i32, i32
  }
  func.func @transform_1(%arg0: i32, %arg1: i32, %arg2: i32) -> (i32, i32, i32) {
    %c0_i32 = arith.constant 0 : i32
    %c0_i32_0 = arith.constant 0 : i32
    return %arg1, %c0_i32, %arg2 : i32, i32, i32
  }
  func.func @transform_2(%arg0: i32, %arg1: i32, %arg2: i32) -> (i32, i32) {
    %c0_i32 = arith.constant 0 : i32
    %c0_i32_0 = arith.constant 0 : i32
    %c0_i32_1 = arith.constant 0 : i32
    return %c0_i32, %c0_i32_0 : i32, i32
  }
  func.func @transform_3(%arg0: i32, %arg1: i32, %arg2: i32) -> (i32, i32) {
    %c0_i32 = arith.constant 0 : i32
    %c0_i32_0 = arith.constant 0 : i32
    %c0_i32_1 = arith.constant 0 : i32
    return %c0_i32, %c0_i32_0 : i32, i32
  }
  func.func @transform_4(%arg0: i32, %arg1: i32, %arg2: i32) -> (i32, i32) {
    %c0_i32 = arith.constant 0 : i32
    %c0_i32_0 = arith.constant 0 : i32
    %c0_i32_1 = arith.constant 0 : i32
    return %c0_i32, %c0_i32_0 : i32, i32
  }
  func.func @transform_5(%arg0: i32, %arg1: i32, %arg2: i32) -> (i32, i32, i32) {
    %0 = arith.muli %arg1, %arg0 : i32
    %1 = arith.muli %arg2, %arg0 : i32
    %c0_i32 = arith.constant 0 : i32
    %c0_i32_0 = arith.constant 0 : i32
    return %0, %c0_i32, %1 : i32, i32, i32
  }
}

</mosaic_0001>

<llo_original>
// kernel: tpu_custom_call.1
$region0: #{tpu_custom_call.1}
  #allocation0 [shape = 'u32[]', space=smem, size = 0x4, offset = 0x4, fixed_abs, tag = 'smem constant byte address 0x4 - core index']
  #allocation1 [shape = 'u32[144,128]{1,0:T(1,128)}', space=vmem, size = 0x12000, scoped, tag = 'internal scratch']
  #allocation2 [shape = 'f32[144,1]{1,0:T(8,128)}', space=vmem, size = 0x12000, scoped, tag = 'scratch operand']
  #allocation3 [shape = 'f32[144,1]{1,0:T(8,128)}', space=vmem, size = 0x12000, scoped, tag = 'scratch operand']
  #allocation4 [shape = 'f32[144,1]{1,0:T(8,128)}', space=vmem, size = 0x12000, scoped, tag = 'scratch operand']
  #allocation5 [shape = 'f32[144,1]{1,0:T(8,128)}', space=vmem, size = 0x12000, scoped, tag = 'scratch operand']
  %s0 = inlined_call_operand.vmem [shape: f32[2,24,256], index: 0, kind: input, shape index: {}]
  %s1 = inlined_call_operand.vmem [shape: f32[2,24,256], index: 1, kind: input, shape index: {}]
  %s2 = inlined_call_operand.vmem [shape: f32[144,24], index: 2, kind: input, shape index: {}]
  %s3 = inlined_call_operand.vmem [shape: f32[144,1], index: 3, kind: input, shape index: {}]
  %s4 = inlined_call_operand.vmem [shape: f32[144,1], index: 4, kind: input, shape index: {}]
  %s5 = inlined_call_operand.hbm [shape: f32[2,144,256], index: 5, kind: output, shape index: {}]
  %s6 = sld [smem:[#allocation0]]
  $region69: #{tpu_custom_call.1} parent=0
    _
  %s8 = ssub.s32 1, %s6
  %s9 = scalar_select 0, %s8, %s6
  $region1: #{tpu_custom_call.1} parent=0
    #allocation6 [shape = 'u8[294912]{0}', space=vmem, size = 0x48000, scoped, tag = 'output window, operand 0']
    #allocation7 [shape = 's32[2]{0}', space=sflag, size = 0x8, scoped, tag = 'scoped memory for tpu_custom_call.1']
    %10 = vsyncpa [#allocation7], 0
    %s11 = scalar_lea.sflag [#allocation7], 1
    %12 = vsyncpa %s11, 0
    loop: start=0, step=1, limit=6
    $region2: #{tpu_custom_call.1} parent=1 // loop_pre_header
      _
    $region3: #{tpu_custom_call.1} parent=1 // loop_header
      %s14 = sphi 0, %s18
      %p15 = scmp.ge.s32.totalorder %s14, 6
      %s21 = sphi 0, %s40
      %s22 = sphi 0, %s36
      %s23 = sphi 0, %s32
      %s24 = sphi 0, %s21
      %s25 = sphi 0, %s22
      %s26 = sphi 0, %s23
      %s27 = sphi 0, %s24
      %s28 = sphi 0, %s25
      %s29 = sphi 0, %s26
      %s45 = sphi 0, %s47
      %s48 = sphi 0, %s45
      %s49 = sphi 0, %s48
      %s65 = sphi 0, %s49
      %s73 = sphi 0, %s75
      %s76 = sphi 0, %s73
      %s77 = sphi 0, %s76
      %s93 = sphi 0, %s77
      %s97 = sphi 0, %s97
      %s99 = sphi 0, %s97
      %s100 = sphi 0, %s99
      %s114 = sphi 0, %s100
      %s118 = sphi 0, %s118
      %s120 = sphi 0, %s118
      %s121 = sphi 0, %s120
      %s135 = sphi 0, %s121
      %s139 = sphi 0, %s139
      %s141 = sphi 0, %s139
      %s142 = sphi 0, %s141
      %s156 = sphi 0, %s142
      %s168 = sphi 0, %s170
      %s171 = sphi 0, %s168
      %s172 = sphi 0, %s171
      %s188 = sphi 0, %s172
    $region4: #{tpu_custom_call.1} parent=1 // loop_header_branch
      %17 = sbr.rel (%p15) target = $region8
    $region5: #{tpu_custom_call.1} parent=1 // loop_body
      %s19 = ssub.s32 %s14, 1
      %s20 = ssub.s32 %s14, 2
      %s30 = sadd.s32 1, %s23
      %p31 = scmp.ge.s32.totalorder %s30, 1
      %s32 = scalar_select %p31, 0, %s30
      %s33 = sadd.s32 1, %s22
      %s34 = scalar_select %p31, %s33, %s22
      %p35 = scmp.ge.s32.totalorder %s34, 2
      %s36 = scalar_select %p35, 0, %s34
      %s37 = sadd.s32 1, %s21
      %s38 = scalar_select %p35, %s37, %s21
      %p39 = scmp.ge.s32.totalorder %s38, 2
      %s40 = scalar_select %p39, 0, %s38
      %s41 = ssub.s32 %s22, %s36
      %s42 = ssub.s32 %s23, %s32
      %s43 = sor.u32 %s41, %s42
      %p44 = scmp.eq.s32.totalorder %s43, 0
      %s46 = sadd.s32 %s45, 1
      %s47 = scalar_select %p44, %s45, %s46
      %p50 = pneg %p44
      %p51 = scmp.eq.s32.totalorder %s14, 3
      %p52 = por %p50, %p51
      %p53 = scmp.ne.s32.totalorder %s45, %s48
      %p54 = scmp.eq.s32.totalorder %s14, 0
      %p55 = por %p53, %p54
      %p56 = scmp.ne.s32.totalorder %s45, %s48
      %p57 = scmp.eq.s32.totalorder %s19, 3
      %p58 = por %p56, %p57
      %p59 = scmp.ne.s32.totalorder %s48, %s49
      %p60 = scmp.eq.s32.totalorder %s19, 0
      %p61 = por %p59, %p60
      %p62 = scmp.ne.s32.totalorder %s48, %s49
      %p63 = scmp.eq.s32.totalorder %s20, 3
      %p64 = por %p62, %p63
      %p66 = scmp.ne.s32.totalorder %s49, %s65
      %p67 = scmp.eq.s32.totalorder %s20, 0
      %p68 = por %p66, %p67
      %s69 = ssub.s32 %s22, %s36
      %s70 = ssub.s32 %s23, %s32
      %s71 = sor.u32 %s69, %s70
      %p72 = scmp.eq.s32.totalorder %s71, 0
      %s74 = sadd.s32 %s73, 1
      %s75 = scalar_select %p72, %s73, %s74
      %p78 = pneg %p72
      %p79 = scmp.eq.s32.totalorder %s14, 3
      %p80 = por %p78, %p79
      %p81 = scmp.ne.s32.totalorder %s73, %s76
      %p82 = scmp.eq.s32.totalorder %s14, 0
      %p83 = por %p81, %p82
      %p84 = scmp.ne.s32.totalorder %s73, %s76
      %p85 = scmp.eq.s32.totalorder %s19, 3
      %p86 = por %p84, %p85
      %p87 = scmp.ne.s32.totalorder %s76, %s77
      %p88 = scmp.eq.s32.totalorder %s19, 0
      %p89 = por %p87, %p88
      %p90 = scmp.ne.s32.totalorder %s76, %s77
      %p91 = scmp.eq.s32.totalorder %s20, 3
      %p92 = por %p90, %p91
      %p94 = scmp.ne.s32.totalorder %s77, %s93
      %p95 = scmp.eq.s32.totalorder %s20, 0
      %p96 = por %p94, %p95
      %s98 = sadd.s32 %s97, 1
      %p101 = scmp.eq.s32.totalorder %s14, 3
      %p102 = scmp.ne.s32.totalorder %s97, %s99
      %p103 = scmp.eq.s32.totalorder %s14, 0
      %p104 = por %p102, %p103
      %p105 = scmp.ne.s32.totalorder %s97, %s99
      %p106 = scmp.eq.s32.totalorder %s19, 3
      %p107 = por %p105, %p106
      %p108 = scmp.ne.s32.totalorder %s99, %s100
      %p109 = scmp.eq.s32.totalorder %s19, 0
      %p110 = por %p108, %p109
      %p111 = scmp.ne.s32.totalorder %s99, %s100
      %p112 = scmp.eq.s32.totalorder %s20, 3
      %p113 = por %p111, %p112
      %p115 = scmp.ne.s32.totalorder %s100, %s114
      %p116 = scmp.eq.s32.totalorder %s20, 0
      %p117 = por %p115, %p116
      %s119 = sadd.s32 %s118, 1
      %p122 = scmp.eq.s32.totalorder %s14, 3
      %p123 = scmp.ne.s32.totalorder %s118, %s120
      %p124 = scmp.eq.s32.totalorder %s14, 0
      %p125 = por %p123, %p124
      %p126 = scmp.ne.s32.totalorder %s118, %s120
      %p127 = scmp.eq.s32.totalorder %s19, 3
      %p128 = por %p126, %p127
      %p129 = scmp.ne.s32.totalorder %s120, %s121
      %p130 = scmp.eq.s32.totalorder %s19, 0
      %p131 = por %p129, %p130
      %p132 = scmp.ne.s32.totalorder %s120, %s121
      %p133 = scmp.eq.s32.totalorder %s20, 3
      %p134 = por %p132, %p133
      %p136 = scmp.ne.s32.totalorder %s121, %s135
      %p137 = scmp.eq.s32.totalorder %s20, 0
      %p138 = por %p136, %p137
      %s140 = sadd.s32 %s139, 1
      %p143 = scmp.eq.s32.totalorder %s14, 3
      %p144 = scmp.ne.s32.totalorder %s139, %s141
      %p145 = scmp.eq.s32.totalorder %s14, 0
      %p146 = por %p144, %p145
      %p147 = scmp.ne.s32.totalorder %s139, %s141
      %p148 = scmp.eq.s32.totalorder %s19, 3
      %p149 = por %p147, %p148
      %p150 = scmp.ne.s32.totalorder %s141, %s142
      %p151 = scmp.eq.s32.totalorder %s19, 0
      %p152 = por %p150, %p151
      %p153 = scmp.ne.s32.totalorder %s141, %s142
      %p154 = scmp.eq.s32.totalorder %s20, 3
      %p155 = por %p153, %p154
      %p157 = scmp.ne.s32.totalorder %s142, %s156
      %p158 = scmp.eq.s32.totalorder %s20, 0
      %p159 = por %p157, %p158
      %s160 = smul.u32 %s22, %s21
      %s161 = smul.u32 %s23, %s21
      %s162 = smul.u32 %s36, %s40
      %s163 = smul.u32 %s32, %s40
      %s164 = ssub.s32 %s160, %s162
      %s165 = ssub.s32 %s161, %s163
      %s166 = sor.u32 %s164, %s165
      %p167 = scmp.eq.s32.totalorder %s166, 0
      %s169 = sadd.s32 %s168, 1
      %s170 = scalar_select %p167, %s168, %s169
      %p173 = pneg %p167
      %p174 = scmp.eq.s32.totalorder %s14, 3
      %p175 = por %p173, %p174
      %p176 = scmp.ne.s32.totalorder %s168, %s171
      %p177 = scmp.eq.s32.totalorder %s14, 0
      %p178 = por %p176, %p177
      %p179 = scmp.ne.s32.totalorder %s168, %s171
      %p180 = scmp.eq.s32.totalorder %s19, 3
      %p181 = por %p179, %p180
      %p182 = scmp.ne.s32.totalorder %s171, %s172
      %p183 = scmp.eq.s32.totalorder %s19, 0
      %p184 = por %p182, %p183
      %p185 = scmp.ne.s32.totalorder %s171, %s172
      %p186 = scmp.eq.s32.totalorder %s20, 3
      %p187 = por %p185, %p186
      %p189 = scmp.ne.s32.totalorder %s172, %s188
      %p190 = scmp.eq.s32.totalorder %s20, 0
      %p191 = por %p189, %p190
      %p192 = scmp.le.s32.totalorder 1, %s14
      %p193 = scmp.lt.s32.totalorder %s14, 5
      %p194 = pnand %p192, %p193
      %p195 = pneg %p194
      // Predicated region
      $region9: #{tpu_custom_call.1} parent=5 // pred_check
        _
      $region10: #{tpu_custom_call.1} parent=5 // pred_check_branch
        %197 = sbr.rel (%p194) target = $region12
      $region11: #{tpu_custom_call.1} parent=5 // pred_region
        %s198 = ssub.s32 %s14, 1
        // Predicated region
        $region13: #{tpu_custom_call.1} parent=11 // pred_check
          %p199 = pneg %p110
        $region14: #{tpu_custom_call.1} parent=11 // pred_check_branch
          %201 = sbr.rel (%p199) target = $region16
        $region15: #{tpu_custom_call.1} parent=11 // pred_region
          _
        $region16: #{tpu_custom_call.1} parent=11 // pred_fallthru
          _
        // Predicated region
        $region17: #{tpu_custom_call.1} parent=11 // pred_check
          %p202 = pneg %p131
        $region18: #{tpu_custom_call.1} parent=11 // pred_check_branch
          %204 = sbr.rel (%p202) target = $region20
        $region19: #{tpu_custom_call.1} parent=11 // pred_region
          _
        $region20: #{tpu_custom_call.1} parent=11 // pred_fallthru
          _
        // Predicated region
        $region21: #{tpu_custom_call.1} parent=11 // pred_check
          %p205 = pneg %p152
        $region22: #{tpu_custom_call.1} parent=11 // pred_check_branch
          %207 = sbr.rel (%p205) target = $region24
        $region23: #{tpu_custom_call.1} parent=11 // pred_region
          _
        $region24: #{tpu_custom_call.1} parent=11 // pred_fallthru
          _
      $region12: #{tpu_custom_call.1} parent=5 // pred_fallthru
        _
      %p208 = scmp.lt.s32.totalorder %s14, 4
      // Predicated region
      $region25: #{tpu_custom_call.1} parent=5 // pred_check
        %p209 = pneg %p208
      $region26: #{tpu_custom_call.1} parent=5 // pred_check_branch
        %211 = sbr.rel (%p209) target = $region28
      $region27: #{tpu_custom_call.1} parent=5 // pred_region
        // Predicated region
        $region29: #{tpu_custom_call.1} parent=27 // pred_check
          %p212 = pneg %p55
        $region30: #{tpu_custom_call.1} parent=27 // pred_check_branch
          %214 = sbr.rel (%p212) target = $region32
        $region31: #{tpu_custom_call.1} parent=27 // pred_region
          %s215 = smul.u32 2, %s23
          %p216 = scmp.lt.s32.totalorder %s22, 1
          %s217 = scalar_select %p216, %s22, 1
          %p218 = scmp.lt.s32.totalorder %s215, 1
          %s219 = scalar_select %p218, %s215, 1
          %s220 = smul.addr %s217, 6
          %s221 = sadd.s32 %s219, %s220
          %s222 = smul.addr %s221, 8
          %s223 = scalar_lea.vmem %s0, %s222
          %s224 = smul.u32 2, %s23
        $region32: #{tpu_custom_call.1} parent=27 // pred_fallthru
          _
        // Predicated region
        $region33: #{tpu_custom_call.1} parent=27 // pred_check
          %p225 = pneg %p83
        $region34: #{tpu_custom_call.1} parent=27 // pred_check_branch
          %227 = sbr.rel (%p225) target = $region36
        $region35: #{tpu_custom_call.1} parent=27 // pred_region
          %s228 = smul.u32 2, %s23
          %p229 = scmp.lt.s32.totalorder %s22, 1
          %s230 = scalar_select %p229, %s22, 1
          %p231 = scmp.lt.s32.totalorder %s228, 1
          %s232 = scalar_select %p231, %s228, 1
          %s233 = smul.addr %s230, 6
          %s234 = sadd.s32 %s232, %s233
          %s235 = smul.addr %s234, 8
          %s236 = scalar_lea.vmem %s1, %s235
          %s237 = smul.u32 2, %s23
        $region36: #{tpu_custom_call.1} parent=27 // pred_fallthru
          _
      $region28: #{tpu_custom_call.1} parent=5 // pred_fallthru
        _
      %p238 = scmp.le.s32.totalorder 1, %s14
      %p239 = scmp.lt.s32.totalorder %s14, 5
      %p240 = pnand %p238, %p239
      %p241 = pneg %p240
      // Predicated region
      $region37: #{tpu_custom_call.1} parent=5 // pred_check
        _
      $region38: #{tpu_custom_call.1} parent=5 // pred_check_branch
        %243 = sbr.rel (%p240) target = $region40
      $region39: #{tpu_custom_call.1} parent=5 // pred_region
        %s244 = ssub.s32 %s14, 1
        %s245 = smul.u32 2, %s26
        %p246 = scmp.lt.s32.totalorder %s25, 1
        %s247 = scalar_select %p246, %s25, 1
        %p248 = scmp.lt.s32.totalorder %s245, 1
        %s249 = scalar_select %p248, %s245, 1
        %s250 = smul.addr %s247, 6
        %s251 = sadd.s32 %s249, %s250
        %s252 = smul.addr %s251, 8
        %s253 = scalar_lea.vmem %s0, %s252
        %p254 = pneg %p61
        %p255 = pneg %p58
        %s256 = smul.u32 2, %s26
        %p257 = scmp.lt.s32.totalorder %s25, 1
        %s258 = scalar_select %p257, %s25, 1
        %p259 = scmp.lt.s32.totalorder %s256, 1
        %s260 = scalar_select %p259, %s256, 1
        %s261 = smul.addr %s258, 6
        %s262 = sadd.s32 %s260, %s261
        %s263 = smul.addr %s262, 8
        %s264 = scalar_lea.vmem %s1, %s263
        %p265 = pneg %p89
        %p266 = pneg %p86
        %p267 = pneg %p110
        %p268 = pneg %p107
        %p269 = pneg %p131
        %p270 = pneg %p128
        %p271 = pneg %p152
        %p272 = pneg %p149
        %p273 = pneg %p184
        %p274 = pneg %p181
        %s275 = sand.u32 %s171, 1
        %s276 = scalar_lea.sflag [#allocation7], %s275
        %s277 = sand.u32 %s171, 1
        %s278 = smul.addr %s277, 288
        %s279 = scalar_lea.vmem [#allocation6], %s278
        %s280 = smul.u32 2, %s26
        %p281 = scmp.lt.s32.totalorder %s25, 1
        %s282 = scalar_select %p281, %s25, 1
        %p283 = scmp.lt.s32.totalorder %s280, 1
        %s284 = scalar_select %p283, %s280, 1
        %s285 = smul.addr %s282, 6
        %s286 = sadd.s32 %s284, %s285
        %s287 = smul.addr %s286, 8
        %s288 = scalar_lea.vmem %s0, %s287
        %s289 = smul.u32 2, %s26
        %s290 = smul.u32 2, %s26
        %p291 = scmp.lt.s32.totalorder %s25, 1
        %s292 = scalar_select %p291, %s25, 1
        %p293 = scmp.lt.s32.totalorder %s290, 1
        %s294 = scalar_select %p293, %s290, 1
        %s295 = smul.addr %s292, 6
        %s296 = sadd.s32 %s294, %s295
        %s297 = smul.addr %s296, 8
        %s298 = scalar_lea.vmem %s1, %s297
        %s299 = smul.u32 2, %s26
        %s300 = smul.u32 %s25, %s24
        %s301 = smul.u32 %s26, %s24
        %s302 = smul.u32 2, %s301
        %v303 = vld [vmem:[%s288] sm:$0xff]
        %v304 = vld [vmem:[%s288 + $0x8] sm:$0xff]
        %v305 = vld [vmem:[%s288 + $0x10] sm:$0xff]
        %v306 = vld [vmem:[%s288 + $0x18] sm:$0xff]
        %v307 = vld [vmem:[%s288 + $0x20] sm:$0xff]
        %v308 = vld [vmem:[%s288 + $0x28] sm:$0xff]
        %v309 = vld [vmem:[%s298] sm:$0xff]
        %v310 = vld [vmem:[%s298 + $0x8] sm:$0xff]
        %v311 = vld [vmem:[%s298 + $0x10] sm:$0xff]
        %v312 = vld [vmem:[%s298 + $0x18] sm:$0xff]
        %v313 = vld [vmem:[%s298 + $0x20] sm:$0xff]
        %v314 = vld [vmem:[%s298 + $0x28] sm:$0xff]
        %v315 = vadd.f32 %v303, %v309
        %v316 = vadd.f32 %v304, %v310
        %v317 = vadd.f32 %v305, %v311
        %v318 = vadd.f32 %v306, %v312
        %v319 = vadd.f32 %v307, %v313
        %v320 = vadd.f32 %v308, %v314
        %v321 = vld [vmem:[%s2] sm:$0xff]
        %v322 = vld [vmem:[%s2 + $0x8] sm:$0xff]
        %v323 = vld [vmem:[%s2 + $0x10] sm:$0xff]
        %v324 = vld [vmem:[%s2 + $0x18] sm:$0xff]
        %v325 = vld [vmem:[%s2 + $0x20] sm:$0xff]
        %v326 = vld [vmem:[%s2 + $0x28] sm:$0xff]
        %v327 = vld [vmem:[%s2 + $0x30] sm:$0xff]
        %v328 = vld [vmem:[%s2 + $0x38] sm:$0xff]
        %v329 = vld [vmem:[%s2 + $0x40] sm:$0xff]
        %v330 = vld [vmem:[%s2 + $0x48] sm:$0xff]
        %v331 = vld [vmem:[%s2 + $0x50] sm:$0xff]
        %v332 = vld [vmem:[%s2 + $0x58] sm:$0xff]
        %v333 = vld [vmem:[%s2 + $0x60] sm:$0xff]
        %v334 = vld [vmem:[%s2 + $0x68] sm:$0xff]
        %v335 = vld [vmem:[%s2 + $0x70] sm:$0xff]
        %v336 = vld [vmem:[%s2 + $0x78] sm:$0xff]
        %v337 = vld [vmem:[%s2 + $0x80] sm:$0xff]
        %v338 = vld [vmem:[%s2 + $0x88] sm:$0xff]
        %vm339 = vcmask 195584
        %v341 = vsel %vm339, %v321, 0
        %v344 = vsel %vm339, %v322, 0
        %v347 = vsel %vm339, %v323, 0
        %v350 = vsel %vm339, %v324, 0
        %v353 = vsel %vm339, %v325, 0
        %v356 = vsel %vm339, %v326, 0
        %v359 = vsel %vm339, %v327, 0
        %v362 = vsel %vm339, %v328, 0
        %v365 = vsel %vm339, %v329, 0
        %v368 = vsel %vm339, %v330, 0
        %v371 = vsel %vm339, %v331, 0
        %v374 = vsel %vm339, %v332, 0
        %v377 = vsel %vm339, %v333, 0
        %v380 = vsel %vm339, %v334, 0
        %v383 = vsel %vm339, %v335, 0
        %v386 = vsel %vm339, %v336, 0
        %v389 = vsel %vm339, %v337, 0
        %v392 = vsel %vm339, %v338, 0
        %394 = vmatprep.subr.mxu0 %v316
        %395 = vmatpush1.msra.mxu0 %v315
        %396 = vmatprep.subr.mxu0 %v318
        %397 = vmatpush1.msra.mxu0 %v317
        %398 = vmatprep.subr.mxu0 %v320
        %399 = vmatpush1.msra.mxu0 %v319
        %400 = vmatprep.subr.mxu0 0.0
        %401 = vmatpush1.msra.mxu0 0.0
        %402 = vmatprep.subr.mxu0 0.0
        %403 = vmatpush1.msra.mxu0 0.0
        %404 = vmatprep.subr.mxu0 0.0
        %405 = vmatpush1.msra.mxu0 0.0
        %406 = vmatprep.subr.mxu0 0.0
        %407 = vmatpush1.msra.mxu0 0.0
        %408 = vmatprep.subr.mxu0 0.0
        %409 = vmatpush1.msra.mxu0 0.0
        %410 = vmatprep.subr.mxu0 0.0
        %411 = vmatpush1.msra.mxu0 0.0
        %412 = vmatprep.subr.mxu0 0.0
        %413 = vmatpush1.msra.mxu0 0.0
        %414 = vmatprep.subr.mxu0 0.0
        %415 = vmatpush1.msra.mxu0 0.0
        %416 = vmatprep.subr.mxu0 0.0
        %417 = vmatpush1.msra.mxu0 0.0
        %418 = vmatprep.subr.mxu0 0.0
        %419 = vmatpush1.msra.mxu0 0.0
        %420 = vmatprep.subr.mxu0 0.0
        %421 = vmatpush1.msra.mxu0 0.0
        %422 = vmatprep.subr.mxu0 0.0
        %423 = vmatpush1.msra.mxu0 0.0
        %424 = vmatprep.subr.mxu0 0.0
        %425 = vmatpush1.msra.mxu0 0.0
        %426 = vmatprep.subr.mxu0 0.0
        %427 = vmatpush1.msra.mxu0 0.0
        %428 = vmatprep.subr.mxu0 0.0
        %429 = vmatpush1.msra.mxu0 0.0
        %430 = vmatprep.subr.mxu0 0.0
        %431 = vmatpush1.msra.mxu0 0.0
        %432 = vmatprep.subr.mxu0 0.0
        %433 = vmatpush1.msra.mxu0 0.0
        %434 = vmatprep.subr.mxu0 0.0
        %435 = vmatpush1.msra.mxu0 0.0
        %436 = vmatprep.subr.mxu0 0.0
        %437 = vmatpush1.msra.mxu0 0.0
        %438 = vmatprep.subr.mxu0 0.0
        %439 = vmatpush1.msra.mxu0 0.0
        %440 = vmatprep.subr.mxu0 0.0
        %441 = vmatpush1.msra.mxu0 0.0
        %442 = vmatprep.subr.mxu0 0.0
        %443 = vmatpush1.msra.mxu0 0.0
        %444 = vmatprep.subr.mxu0 0.0
        %445 = vmatpush1.msra.mxu0 0.0
        %446 = vmatprep.subr.mxu0 0.0
        %447 = vmatpush1.msra.mxu0 0.0
        %448 = vmatprep.subr.mxu0 0.0
        %449 = vmatpush1.msra.mxu0 0.0
        %450 = vmatprep.subr.mxu0 0.0
        %451 = vmatpush1.msra.mxu0 0.0
        %452 = vmatprep.subr.mxu0 0.0
        %453 = vmatpush1.msra.mxu0 0.0
        %454 = vmatprep.subr.mxu0 0.0
        %455 = vmatpush1.msra.mxu0 0.0
        %456 = vmatprep.subr.mxu0 0.0
        %457 = vmatpush1.msra.mxu0 0.0
        %458 = vmatprep.mubr.f32.mxu0 0.0
        %459 = vmatmul.mubr.f32.gmra.mrb[0].mxu0 %v341
        %v460 = vpop.f32.mrb[0].mxu0
        %v461 = vadd.f32 0.0, %v460
        %v462 = vpop.f32.mrb[0].mxu0
        %v463 = vadd.f32 0.0, %v462
        %464 = vmatprep.mubr.f32.mxu0 0.0
        %465 = vmatmul.mubr.f32.gmra.mrb[0].mxu0 %v344
        %v466 = vpop.f32.mrb[0].mxu0
        %v467 = vadd.f32 0.0, %v466
        %v468 = vpop.f32.mrb[0].mxu0
        %v469 = vadd.f32 0.0, %v468
        %470 = vmatprep.mubr.f32.mxu0 0.0
        %471 = vmatmul.mubr.f32.gmra.mrb[0].mxu0 %v347
        %v472 = vpop.f32.mrb[0].mxu0
        %v473 = vadd.f32 0.0, %v472
        %v474 = vpop.f32.mrb[0].mxu0
        %v475 = vadd.f32 0.0, %v474
        %476 = vmatprep.mubr.f32.mxu0 0.0
        %477 = vmatmul.mubr.f32.gmra.mrb[0].mxu0 %v350
        %v478 = vpop.f32.mrb[0].mxu0
        %v479 = vadd.f32 0.0, %v478
        %v480 = vpop.f32.mrb[0].mxu0
        %v481 = vadd.f32 0.0, %v480
        %482 = vmatprep.mubr.f32.mxu0 0.0
        %483 = vmatmul.mubr.f32.gmra.mrb[0].mxu0 %v353
        %v484 = vpop.f32.mrb[0].mxu0
        %v485 = vadd.f32 0.0, %v484
        %v486 = vpop.f32.mrb[0].mxu0
        %v487 = vadd.f32 0.0, %v486
        %488 = vmatprep.mubr.f32.mxu0 0.0
        %489 = vmatmul.mubr.f32.gmra.mrb[0].mxu0 %v356
        %v490 = vpop.f32.mrb[0].mxu0
        %v491 = vadd.f32 0.0, %v490
        %v492 = vpop.f32.mrb[0].mxu0
        %v493 = vadd.f32 0.0, %v492
        %494 = vmatprep.mubr.f32.mxu0 0.0
        %495 = vmatmul.mubr.f32.gmra.mrb[0].mxu0 %v359
        %v496 = vpop.f32.mrb[0].mxu0
        %v497 = vadd.f32 0.0, %v496
        %v498 = vpop.f32.mrb[0].mxu0
        %v499 = vadd.f32 0.0, %v498
        %500 = vmatprep.mubr.f32.mxu0 0.0
        %501 = vmatmul.mubr.f32.gmra.mrb[0].mxu0 %v362
        %v502 = vpop.f32.mrb[0].mxu0
        %v503 = vadd.f32 0.0, %v502
        %v504 = vpop.f32.mrb[0].mxu0
        %v505 = vadd.f32 0.0, %v504
        %506 = vmatprep.mubr.f32.mxu0 0.0
        %507 = vmatmul.mubr.f32.gmra.mrb[0].mxu0 %v365
        %v508 = vpop.f32.mrb[0].mxu0
        %v509 = vadd.f32 0.0, %v508
        %v510 = vpop.f32.mrb[0].mxu0
        %v511 = vadd.f32 0.0, %v510
        %512 = vmatprep.mubr.f32.mxu0 0.0
        %513 = vmatmul.mubr.f32.gmra.mrb[0].mxu0 %v368
        %v514 = vpop.f32.mrb[0].mxu0
        %v515 = vadd.f32 0.0, %v514
        %v516 = vpop.f32.mrb[0].mxu0
        %v517 = vadd.f32 0.0, %v516
        %518 = vmatprep.mubr.f32.mxu0 0.0
        %519 = vmatmul.mubr.f32.gmra.mrb[0].mxu0 %v371
        %v520 = vpop.f32.mrb[0].mxu0
        %v521 = vadd.f32 0.0, %v520
        %v522 = vpop.f32.mrb[0].mxu0
        %v523 = vadd.f32 0.0, %v522
        %524 = vmatprep.mubr.f32.mxu0 0.0
        %525 = vmatmul.mubr.f32.gmra.mrb[0].mxu0 %v374
        %v526 = vpop.f32.mrb[0].mxu0
        %v527 = vadd.f32 0.0, %v526
        %v528 = vpop.f32.mrb[0].mxu0
        %v529 = vadd.f32 0.0, %v528
        %530 = vmatprep.mubr.f32.mxu0 0.0
        %531 = vmatmul.mubr.f32.gmra.mrb[0].mxu0 %v377
        %v532 = vpop.f32.mrb[0].mxu0
        %v533 = vadd.f32 0.0, %v532
        %v534 = vpop.f32.mrb[0].mxu0
        %v535 = vadd.f32 0.0, %v534
        %536 = vmatprep.mubr.f32.mxu0 0.0
        %537 = vmatmul.mubr.f32.gmra.mrb[0].mxu0 %v380
        %v538 = vpop.f32.mrb[0].mxu0
        %v539 = vadd.f32 0.0, %v538
        %v540 = vpop.f32.mrb[0].mxu0
        %v541 = vadd.f32 0.0, %v540
        %542 = vmatprep.mubr.f32.mxu0 0.0
        %543 = vmatmul.mubr.f32.gmra.mrb[0].mxu0 %v383
        %v544 = vpop.f32.mrb[0].mxu0
        %v545 = vadd.f32 0.0, %v544
        %v546 = vpop.f32.mrb[0].mxu0
        %v547 = vadd.f32 0.0, %v546
        %548 = vmatprep.mubr.f32.mxu0 0.0
        %549 = vmatmul.mubr.f32.gmra.mrb[0].mxu0 %v386
        %v550 = vpop.f32.mrb[0].mxu0
        %v551 = vadd.f32 0.0, %v550
        %v552 = vpop.f32.mrb[0].mxu0
        %v553 = vadd.f32 0.0, %v552
        %554 = vmatprep.mubr.f32.mxu0 0.0
        %555 = vmatmul.mubr.f32.gmra.mrb[0].mxu0 %v389
        %v556 = vpop.f32.mrb[0].mxu0
        %v557 = vadd.f32 0.0, %v556
        %v558 = vpop.f32.mrb[0].mxu0
        %v559 = vadd.f32 0.0, %v558
        %560 = vmatprep.mubr.f32.mxu0 0.0
        %561 = vmatmul.mubr.f32.gmra.mrb[0].mxu0 %v392
        %v562 = vpop.f32.mrb[0].mxu0
        %v563 = vadd.f32 0.0, %v562
        %v564 = vpop.f32.mrb[0].mxu0
        %v565 = vadd.f32 0.0, %v564
        %566 = vdwg.mxu0
        %p567 = scmp.eq.s32.totalorder %s24, 0
        // Predicated region
        $region41: #{tpu_custom_call.1} parent=39 // pred_check
          %p568 = pneg %p567
        $region42: #{tpu_custom_call.1} parent=39 // pred_check_branch
          %570 = sbr.rel (%p568) target = $region44
        $region43: #{tpu_custom_call.1} parent=39 // pred_region
          %p571 = scmp.eq.s32.totalorder %s25, 0
          %p572 = scmp.eq.s32.totalorder %s26, 0
          %p573 = pnand %p571, %p572
          %p574 = pneg %p573
          // Predicated region
          $region45: #{tpu_custom_call.1} parent=43 // pred_check
            _
          $region46: #{tpu_custom_call.1} parent=43 // pred_check_branch
            %576 = sbr.rel (%p573) target = $region48
          $region47: #{tpu_custom_call.1} parent=43 // pred_region
            %vm577 = vcmask 7168
            %578 = vst.msk [vmem:[#allocation2] sm:$0xff] %vm577, 0.0
            %579 = vst.msk [vmem:[#allocation2 + $0x8] sm:$0xff] %vm577, 0.0
            %580 = vst.msk [vmem:[#allocation2 + $0x10] sm:$0xff] %vm577, 0.0
            %581 = vst.msk [vmem:[#allocation2 + $0x18] sm:$0xff] %vm577, 0.0
            %582 = vst.msk [vmem:[#allocation2 + $0x20] sm:$0xff] %vm577, 0.0
            %583 = vst.msk [vmem:[#allocation2 + $0x28] sm:$0xff] %vm577, 0.0
            %584 = vst.msk [vmem:[#allocation2 + $0x30] sm:$0xff] %vm577, 0.0
            %585 = vst.msk [vmem:[#allocation2 + $0x38] sm:$0xff] %vm577, 0.0
            %586 = vst.msk [vmem:[#allocation2 + $0x40] sm:$0xff] %vm577, 0.0
            %587 = vst.msk [vmem:[#allocation2 + $0x48] sm:$0xff] %vm577, 0.0
            %588 = vst.msk [vmem:[#allocation2 + $0x50] sm:$0xff] %vm577, 0.0
            %589 = vst.msk [vmem:[#allocation2 + $0x58] sm:$0xff] %vm577, 0.0
            %590 = vst.msk [vmem:[#allocation2 + $0x60] sm:$0xff] %vm577, 0.0
            %591 = vst.msk [vmem:[#allocation2 + $0x68] sm:$0xff] %vm577, 0.0
            %592 = vst.msk [vmem:[#allocation2 + $0x70] sm:$0xff] %vm577, 0.0
            %593 = vst.msk [vmem:[#allocation2 + $0x78] sm:$0xff] %vm577, 0.0
            %594 = vst.msk [vmem:[#allocation2 + $0x80] sm:$0xff] %vm577, 0.0
            %595 = vst.msk [vmem:[#allocation2 + $0x88] sm:$0xff] %vm577, 0.0
            %596 = vst.msk [vmem:[#allocation3] sm:$0xff] %vm577, 0.0
            %597 = vst.msk [vmem:[#allocation3 + $0x8] sm:$0xff] %vm577, 0.0
            %598 = vst.msk [vmem:[#allocation3 + $0x10] sm:$0xff] %vm577, 0.0
            %599 = vst.msk [vmem:[#allocation3 + $0x18] sm:$0xff] %vm577, 0.0
            %600 = vst.msk [vmem:[#allocation3 + $0x20] sm:$0xff] %vm577, 0.0
            %601 = vst.msk [vmem:[#allocation3 + $0x28] sm:$0xff] %vm577, 0.0
            %602 = vst.msk [vmem:[#allocation3 + $0x30] sm:$0xff] %vm577, 0.0
            %603 = vst.msk [vmem:[#allocation3 + $0x38] sm:$0xff] %vm577, 0.0
            %604 = vst.msk [vmem:[#allocation3 + $0x40] sm:$0xff] %vm577, 0.0
            %605 = vst.msk [vmem:[#allocation3 + $0x48] sm:$0xff] %vm577, 0.0
            %606 = vst.msk [vmem:[#allocation3 + $0x50] sm:$0xff] %vm577, 0.0
            %607 = vst.msk [vmem:[#allocation3 + $0x58] sm:$0xff] %vm577, 0.0
            %608 = vst.msk [vmem:[#allocation3 + $0x60] sm:$0xff] %vm577, 0.0
            %609 = vst.msk [vmem:[#allocation3 + $0x68] sm:$0xff] %vm577, 0.0
            %610 = vst.msk [vmem:[#allocation3 + $0x70] sm:$0xff] %vm577, 0.0
            %611 = vst.msk [vmem:[#allocation3 + $0x78] sm:$0xff] %vm577, 0.0
            %612 = vst.msk [vmem:[#allocation3 + $0x80] sm:$0xff] %vm577, 0.0
            %613 = vst.msk [vmem:[#allocation3 + $0x88] sm:$0xff] %vm577, 0.0
          $region48: #{tpu_custom_call.1} parent=43 // pred_fallthru
            _
          %v614 = vld [vmem:[#allocation2] sm:$0xff]
          %v615 = vld [vmem:[#allocation2 + $0x8] sm:$0xff]
          %v616 = vld [vmem:[#allocation2 + $0x10] sm:$0xff]
          %v617 = vld [vmem:[#allocation2 + $0x18] sm:$0xff]
          %v618 = vld [vmem:[#allocation2 + $0x20] sm:$0xff]
          %v619 = vld [vmem:[#allocation2 + $0x28] sm:$0xff]
          %v620 = vld [vmem:[#allocation2 + $0x30] sm:$0xff]
          %v621 = vld [vmem:[#allocation2 + $0x38] sm:$0xff]
          %v622 = vld [vmem:[#allocation2 + $0x40] sm:$0xff]
          %v623 = vld [vmem:[#allocation2 + $0x48] sm:$0xff]
          %v624 = vld [vmem:[#allocation2 + $0x50] sm:$0xff]
          %v625 = vld [vmem:[#allocation2 + $0x58] sm:$0xff]
          %v626 = vld [vmem:[#allocation2 + $0x60] sm:$0xff]
          %v627 = vld [vmem:[#allocation2 + $0x68] sm:$0xff]
          %v628 = vld [vmem:[#allocation2 + $0x70] sm:$0xff]
          %v629 = vld [vmem:[#allocation2 + $0x78] sm:$0xff]
          %v630 = vld [vmem:[#allocation2 + $0x80] sm:$0xff]
          %v631 = vld [vmem:[#allocation2 + $0x88] sm:$0xff]
          %v632 = vadd.f32 %v461, %v463
          %633 = vadd.xlane.f32.xlu0 %v632
          %v634 = vpop.xlane.xlu0 %633
          %v635 = vadd.f32 %v467, %v469
          %636 = vadd.xlane.f32.xlu0 %v635
          %v637 = vpop.xlane.xlu0 %636
          %v638 = vadd.f32 %v473, %v475
          %639 = vadd.xlane.f32.xlu0 %v638
          %v640 = vpop.xlane.xlu0 %639
          %v641 = vadd.f32 %v479, %v481
          %642 = vadd.xlane.f32.xlu0 %v641
          %v643 = vpop.xlane.xlu0 %642
          %v644 = vadd.f32 %v485, %v487
          %645 = vadd.xlane.f32.xlu0 %v644
          %v646 = vpop.xlane.xlu0 %645
          %v647 = vadd.f32 %v491, %v493
          %648 = vadd.xlane.f32.xlu0 %v647
          %v649 = vpop.xlane.xlu0 %648
          %v650 = vadd.f32 %v497, %v499
          %651 = vadd.xlane.f32.xlu0 %v650
          %v652 = vpop.xlane.xlu0 %651
          %v653 = vadd.f32 %v503, %v505
          %654 = vadd.xlane.f32.xlu0 %v653
          %v655 = vpop.xlane.xlu0 %654
          %v656 = vadd.f32 %v509, %v511
          %657 = vadd.xlane.f32.xlu0 %v656
          %v658 = vpop.xlane.xlu0 %657
          %v659 = vadd.f32 %v515, %v517
          %660 = vadd.xlane.f32.xlu0 %v659
          %v661 = vpop.xlane.xlu0 %660
          %v662 = vadd.f32 %v521, %v523
          %663 = vadd.xlane.f32.xlu0 %v662
          %v664 = vpop.xlane.xlu0 %663
          %v665 = vadd.f32 %v527, %v529
          %666 = vadd.xlane.f32.xlu0 %v665
          %v667 = vpop.xlane.xlu0 %666
          %v668 = vadd.f32 %v533, %v535
          %669 = vadd.xlane.f32.xlu0 %v668
          %v670 = vpop.xlane.xlu0 %669
          %v671 = vadd.f32 %v539, %v541
          %672 = vadd.xlane.f32.xlu0 %v671
          %v673 = vpop.xlane.xlu0 %672
          %v674 = vadd.f32 %v545, %v547
          %675 = vadd.xlane.f32.xlu0 %v674
          %v676 = vpop.xlane.xlu0 %675
          %v677 = vadd.f32 %v551, %v553
          %678 = vadd.xlane.f32.xlu0 %v677
          %v679 = vpop.xlane.xlu0 %678
          %v680 = vadd.f32 %v557, %v559
          %681 = vadd.xlane.f32.xlu0 %v680
          %v682 = vpop.xlane.xlu0 %681
          %v683 = vadd.f32 %v563, %v565
          %684 = vadd.xlane.f32.xlu0 %v683
          %v685 = vpop.xlane.xlu0 %684
          %v686 = vadd.f32 %v614, %v634
          %v687 = vadd.f32 %v615, %v637
          %v688 = vadd.f32 %v616, %v640
          %v689 = vadd.f32 %v617, %v643
          %v690 = vadd.f32 %v618, %v646
          %v691 = vadd.f32 %v619, %v649
          %v692 = vadd.f32 %v620, %v652
          %v693 = vadd.f32 %v621, %v655
          %v694 = vadd.f32 %v622, %v658
          %v695 = vadd.f32 %v623, %v661
          %v696 = vadd.f32 %v624, %v664
          %v697 = vadd.f32 %v625, %v667
          %v698 = vadd.f32 %v626, %v670
          %v699 = vadd.f32 %v627, %v673
          %v700 = vadd.f32 %v628, %v676
          %v701 = vadd.f32 %v629, %v679
          %v702 = vadd.f32 %v630, %v682
          %v703 = vadd.f32 %v631, %v685
          %vm704 = vcmask 7168
          %705 = vst.msk [vmem:[#allocation2] sm:$0xff] %vm704, %v686
          %706 = vst.msk [vmem:[#allocation2 + $0x8] sm:$0xff] %vm704, %v687
          %707 = vst.msk [vmem:[#allocation2 + $0x10] sm:$0xff] %vm704, %v688
          %708 = vst.msk [vmem:[#allocation2 + $0x18] sm:$0xff] %vm704, %v689
          %709 = vst.msk [vmem:[#allocation2 + $0x20] sm:$0xff] %vm704, %v690
          %710 = vst.msk [vmem:[#allocation2 + $0x28] sm:$0xff] %vm704, %v691
          %711 = vst.msk [vmem:[#allocation2 + $0x30] sm:$0xff] %vm704, %v692
          %712 = vst.msk [vmem:[#allocation2 + $0x38] sm:$0xff] %vm704, %v693
          %713 = vst.msk [vmem:[#allocation2 + $0x40] sm:$0xff] %vm704, %v694
          %714 = vst.msk [vmem:[#allocation2 + $0x48] sm:$0xff] %vm704, %v695
          %715 = vst.msk [vmem:[#allocation2 + $0x50] sm:$0xff] %vm704, %v696
          %716 = vst.msk [vmem:[#allocation2 + $0x58] sm:$0xff] %vm704, %v697
          %717 = vst.msk [vmem:[#allocation2 + $0x60] sm:$0xff] %vm704, %v698
          %718 = vst.msk [vmem:[#allocation2 + $0x68] sm:$0xff] %vm704, %v699
          %719 = vst.msk [vmem:[#allocation2 + $0x70] sm:$0xff] %vm704, %v700
          %720 = vst.msk [vmem:[#allocation2 + $0x78] sm:$0xff] %vm704, %v701
          %721 = vst.msk [vmem:[#allocation2 + $0x80] sm:$0xff] %vm704, %v702
          %722 = vst.msk [vmem:[#allocation2 + $0x88] sm:$0xff] %vm704, %v703
          %v723 = vld [vmem:[#allocation3] sm:$0xff]
          %v724 = vld [vmem:[#allocation3 + $0x8] sm:$0xff]
          %v725 = vld [vmem:[#allocation3 + $0x10] sm:$0xff]
          %v726 = vld [vmem:[#allocation3 + $0x18] sm:$0xff]
          %v727 = vld [vmem:[#allocation3 + $0x20] sm:$0xff]
          %v728 = vld [vmem:[#allocation3 + $0x28] sm:$0xff]
          %v729 = vld [vmem:[#allocation3 + $0x30] sm:$0xff]
          %v730 = vld [vmem:[#allocation3 + $0x38] sm:$0xff]
          %v731 = vld [vmem:[#allocation3 + $0x40] sm:$0xff]
          %v732 = vld [vmem:[#allocation3 + $0x48] sm:$0xff]
          %v733 = vld [vmem:[#allocation3 + $0x50] sm:$0xff]
          %v734 = vld [vmem:[#allocation3 + $0x58] sm:$0xff]
          %v735 = vld [vmem:[#allocation3 + $0x60] sm:$0xff]
          %v736 = vld [vmem:[#allocation3 + $0x68] sm:$0xff]
          %v737 = vld [vmem:[#allocation3 + $0x70] sm:$0xff]
          %v738 = vld [vmem:[#allocation3 + $0x78] sm:$0xff]
          %v739 = vld [vmem:[#allocation3 + $0x80] sm:$0xff]
          %v740 = vld [vmem:[#allocation3 + $0x88] sm:$0xff]
          %v741 = vmul.f32 %v461, %v461
          %v742 = vmul.f32 %v463, %v463
          %v743 = vmul.f32 %v467, %v467
          %v744 = vmul.f32 %v469, %v469
          %v745 = vmul.f32 %v473, %v473
          %v746 = vmul.f32 %v475, %v475
          %v747 = vmul.f32 %v479, %v479
          %v748 = vmul.f32 %v481, %v481
          %v749 = vmul.f32 %v485, %v485
          %v750 = vmul.f32 %v487, %v487
          %v751 = vmul.f32 %v491, %v491
          %v752 = vmul.f32 %v493, %v493
          %v753 = vmul.f32 %v497, %v497
          %v754 = vmul.f32 %v499, %v499
          %v755 = vmul.f32 %v503, %v503
          %v756 = vmul.f32 %v505, %v505
          %v757 = vmul.f32 %v509, %v509
          %v758 = vmul.f32 %v511, %v511
          %v759 = vmul.f32 %v515, %v515
          %v760 = vmul.f32 %v517, %v517
          %v761 = vmul.f32 %v521, %v521
          %v762 = vmul.f32 %v523, %v523
          %v763 = vmul.f32 %v527, %v527
          %v764 = vmul.f32 %v529, %v529
          %v765 = vmul.f32 %v533, %v533
          %v766 = vmul.f32 %v535, %v535
          %v767 = vmul.f32 %v539, %v539
          %v768 = vmul.f32 %v541, %v541
          %v769 = vmul.f32 %v545, %v545
          %v770 = vmul.f32 %v547, %v547
          %v771 = vmul.f32 %v551, %v551
          %v772 = vmul.f32 %v553, %v553
          %v773 = vmul.f32 %v557, %v557
          %v774 = vmul.f32 %v559, %v559
          %v775 = vmul.f32 %v563, %v563
          %v776 = vmul.f32 %v565, %v565
          %v777 = vadd.f32 %v741, %v742
          %778 = vadd.xlane.f32.xlu0 %v777
          %v779 = vpop.xlane.xlu0 %778
          %v780 = vadd.f32 %v743, %v744
          %781 = vadd.xlane.f32.xlu0 %v780
          %v782 = vpop.xlane.xlu0 %781
          %v783 = vadd.f32 %v745, %v746
          %784 = vadd.xlane.f32.xlu0 %v783
          %v785 = vpop.xlane.xlu0 %784
          %v786 = vadd.f32 %v747, %v748
          %787 = vadd.xlane.f32.xlu0 %v786
          %v788 = vpop.xlane.xlu0 %787
          %v789 = vadd.f32 %v749, %v750
          %790 = vadd.xlane.f32.xlu0 %v789
          %v791 = vpop.xlane.xlu0 %790
          %v792 = vadd.f32 %v751, %v752
          %793 = vadd.xlane.f32.xlu0 %v792
          %v794 = vpop.xlane.xlu0 %793
          %v795 = vadd.f32 %v753, %v754
          %796 = vadd.xlane.f32.xlu0 %v795
          %v797 = vpop.xlane.xlu0 %796
          %v798 = vadd.f32 %v755, %v756
          %799 = vadd.xlane.f32.xlu0 %v798
          %v800 = vpop.xlane.xlu0 %799
          %v801 = vadd.f32 %v757, %v758
          %802 = vadd.xlane.f32.xlu0 %v801
          %v803 = vpop.xlane.xlu0 %802
          %v804 = vadd.f32 %v759, %v760
          %805 = vadd.xlane.f32.xlu0 %v804
          %v806 = vpop.xlane.xlu0 %805
          %v807 = vadd.f32 %v761, %v762
          %808 = vadd.xlane.f32.xlu0 %v807
          %v809 = vpop.xlane.xlu0 %808
          %v810 = vadd.f32 %v763, %v764
          %811 = vadd.xlane.f32.xlu0 %v810
          %v812 = vpop.xlane.xlu0 %811
          %v813 = vadd.f32 %v765, %v766
          %814 = vadd.xlane.f32.xlu0 %v813
          %v815 = vpop.xlane.xlu0 %814
          %v816 = vadd.f32 %v767, %v768
          %817 = vadd.xlane.f32.xlu0 %v816
          %v818 = vpop.xlane.xlu0 %817
          %v819 = vadd.f32 %v769, %v770
          %820 = vadd.xlane.f32.xlu0 %v819
          %v821 = vpop.xlane.xlu0 %820
          %v822 = vadd.f32 %v771, %v772
          %823 = vadd.xlane.f32.xlu0 %v822
          %v824 = vpop.xlane.xlu0 %823
          %v825 = vadd.f32 %v773, %v774
          %826 = vadd.xlane.f32.xlu0 %v825
          %v827 = vpop.xlane.xlu0 %826
          %v828 = vadd.f32 %v775, %v776
          %829 = vadd.xlane.f32.xlu0 %v828
          %v830 = vpop.xlane.xlu0 %829
          %v831 = vadd.f32 %v723, %v779
          %v832 = vadd.f32 %v724, %v782
          %v833 = vadd.f32 %v725, %v785
          %v834 = vadd.f32 %v726, %v788
          %v835 = vadd.f32 %v727, %v791
          %v836 = vadd.f32 %v728, %v794
          %v837 = vadd.f32 %v729, %v797
          %v838 = vadd.f32 %v730, %v800
          %v839 = vadd.f32 %v731, %v803
          %v840 = vadd.f32 %v732, %v806
          %v841 = vadd.f32 %v733, %v809
          %v842 = vadd.f32 %v734, %v812
          %v843 = vadd.f32 %v735, %v815
          %v844 = vadd.f32 %v736, %v818
          %v845 = vadd.f32 %v737, %v821
          %v846 = vadd.f32 %v738, %v824
          %v847 = vadd.f32 %v739, %v827
          %v848 = vadd.f32 %v740, %v830
          %849 = vst.msk [vmem:[#allocation3] sm:$0xff] %vm704, %v831
          %850 = vst.msk [vmem:[#allocation3 + $0x8] sm:$0xff] %vm704, %v832
          %851 = vst.msk [vmem:[#allocation3 + $0x10] sm:$0xff] %vm704, %v833
          %852 = vst.msk [vmem:[#allocation3 + $0x18] sm:$0xff] %vm704, %v834
          %853 = vst.msk [vmem:[#allocation3 + $0x20] sm:$0xff] %vm704, %v835
          %854 = vst.msk [vmem:[#allocation3 + $0x28] sm:$0xff] %vm704, %v836
          %855 = vst.msk [vmem:[#allocation3 + $0x30] sm:$0xff] %vm704, %v837
          %856 = vst.msk [vmem:[#allocation3 + $0x38] sm:$0xff] %vm704, %v838
          %857 = vst.msk [vmem:[#allocation3 + $0x40] sm:$0xff] %vm704, %v839
          %858 = vst.msk [vmem:[#allocation3 + $0x48] sm:$0xff] %vm704, %v840
          %859 = vst.msk [vmem:[#allocation3 + $0x50] sm:$0xff] %vm704, %v841
          %860 = vst.msk [vmem:[#allocation3 + $0x58] sm:$0xff] %vm704, %v842
          %861 = vst.msk [vmem:[#allocation3 + $0x60] sm:$0xff] %vm704, %v843
          %862 = vst.msk [vmem:[#allocation3 + $0x68] sm:$0xff] %vm704, %v844
          %863 = vst.msk [vmem:[#allocation3 + $0x70] sm:$0xff] %vm704, %v845
          %864 = vst.msk [vmem:[#allocation3 + $0x78] sm:$0xff] %vm704, %v846
          %865 = vst.msk [vmem:[#allocation3 + $0x80] sm:$0xff] %vm704, %v847
          %866 = vst.msk [vmem:[#allocation3 + $0x88] sm:$0xff] %vm704, %v848
        $region44: #{tpu_custom_call.1} parent=39 // pred_fallthru
          _
        %p867 = scmp.eq.s32.totalorder %s24, 1
        // Predicated region
        $region49: #{tpu_custom_call.1} parent=39 // pred_check
          %p868 = pneg %p867
        $region50: #{tpu_custom_call.1} parent=39 // pred_check_branch
          %870 = sbr.rel (%p868) target = $region52
        $region51: #{tpu_custom_call.1} parent=39 // pred_region
          %p871 = scmp.eq.s32.totalorder %s25, 0
          %p872 = scmp.eq.s32.totalorder %s26, 0
          %p873 = pnand %p871, %p872
          %p874 = pneg %p873
          // Predicated region
          $region53: #{tpu_custom_call.1} parent=51 // pred_check
            _
          $region54: #{tpu_custom_call.1} parent=51 // pred_check_branch
            %876 = sbr.rel (%p873) target = $region56
          $region55: #{tpu_custom_call.1} parent=51 // pred_region
            %v877 = vld [vmem:[#allocation2] sm:$0xff]
            %v878 = vld [vmem:[#allocation2 + $0x8] sm:$0xff]
            %v879 = vld [vmem:[#allocation2 + $0x10] sm:$0xff]
            %v880 = vld [vmem:[#allocation2 + $0x18] sm:$0xff]
            %v881 = vld [vmem:[#allocation2 + $0x20] sm:$0xff]
            %v882 = vld [vmem:[#allocation2 + $0x28] sm:$0xff]
            %v883 = vld [vmem:[#allocation2 + $0x30] sm:$0xff]
            %v884 = vld [vmem:[#allocation2 + $0x38] sm:$0xff]
            %v885 = vld [vmem:[#allocation2 + $0x40] sm:$0xff]
            %v886 = vld [vmem:[#allocation2 + $0x48] sm:$0xff]
            %v887 = vld [vmem:[#allocation2 + $0x50] sm:$0xff]
            %v888 = vld [vmem:[#allocation2 + $0x58] sm:$0xff]
            %v889 = vld [vmem:[#allocation2 + $0x60] sm:$0xff]
            %v890 = vld [vmem:[#allocation2 + $0x68] sm:$0xff]
            %v891 = vld [vmem:[#allocation2 + $0x70] sm:$0xff]
            %v892 = vld [vmem:[#allocation2 + $0x78] sm:$0xff]
            %v893 = vld [vmem:[#allocation2 + $0x80] sm:$0xff]
            %v894 = vld [vmem:[#allocation2 + $0x88] sm:$0xff]
            %v895 = vmul.f32 %v877, 0.001953125
            %v896 = vmul.f32 %v878, 0.001953125
            %v897 = vmul.f32 %v879, 0.001953125
            %v898 = vmul.f32 %v880, 0.001953125
            %v899 = vmul.f32 %v881, 0.001953125
            %v900 = vmul.f32 %v882, 0.001953125
            %v901 = vmul.f32 %v883, 0.001953125
            %v902 = vmul.f32 %v884, 0.001953125
            %v903 = vmul.f32 %v885, 0.001953125
            %v904 = vmul.f32 %v886, 0.001953125
            %v905 = vmul.f32 %v887, 0.001953125
            %v906 = vmul.f32 %v888, 0.001953125
            %v907 = vmul.f32 %v889, 0.001953125
            %v908 = vmul.f32 %v890, 0.001953125
            %v909 = vmul.f32 %v891, 0.001953125
            %v910 = vmul.f32 %v892, 0.001953125
            %v911 = vmul.f32 %v893, 0.001953125
            %v912 = vmul.f32 %v894, 0.001953125
            %v913 = vld [vmem:[#allocation3] sm:$0xff]
            %v914 = vld [vmem:[#allocation3 + $0x8] sm:$0xff]
            %v915 = vld [vmem:[#allocation3 + $0x10] sm:$0xff]
            %v916 = vld [vmem:[#allocation3 + $0x18] sm:$0xff]
            %v917 = vld [vmem:[#allocation3 + $0x20] sm:$0xff]
            %v918 = vld [vmem:[#allocation3 + $0x28] sm:$0xff]
            %v919 = vld [vmem:[#allocation3 + $0x30] sm:$0xff]
            %v920 = vld [vmem:[#allocation3 + $0x38] sm:$0xff]
            %v921 = vld [vmem:[#allocation3 + $0x40] sm:$0xff]
            %v922 = vld [vmem:[#allocation3 + $0x48] sm:$0xff]
            %v923 = vld [vmem:[#allocation3 + $0x50] sm:$0xff]
            %v924 = vld [vmem:[#allocation3 + $0x58] sm:$0xff]
            %v925 = vld [vmem:[#allocation3 + $0x60] sm:$0xff]
            %v926 = vld [vmem:[#allocation3 + $0x68] sm:$0xff]
            %v927 = vld [vmem:[#allocation3 + $0x70] sm:$0xff]
            %v928 = vld [vmem:[#allocation3 + $0x78] sm:$0xff]
            %v929 = vld [vmem:[#allocation3 + $0x80] sm:$0xff]
            %v930 = vld [vmem:[#allocation3 + $0x88] sm:$0xff]
            %v931 = vmul.f32 %v913, 0.001953125
            %v932 = vmul.f32 %v914, 0.001953125
            %v933 = vmul.f32 %v915, 0.001953125
            %v934 = vmul.f32 %v916, 0.001953125
            %v935 = vmul.f32 %v917, 0.001953125
            %v936 = vmul.f32 %v918, 0.001953125
            %v937 = vmul.f32 %v919, 0.001953125
            %v938 = vmul.f32 %v920, 0.001953125
            %v939 = vmul.f32 %v921, 0.001953125
            %v940 = vmul.f32 %v922, 0.001953125
            %v941 = vmul.f32 %v923, 0.001953125
            %v942 = vmul.f32 %v924, 0.001953125
            %v943 = vmul.f32 %v925, 0.001953125
            %v944 = vmul.f32 %v926, 0.001953125
            %v945 = vmul.f32 %v927, 0.001953125
            %v946 = vmul.f32 %v928, 0.001953125
            %v947 = vmul.f32 %v929, 0.001953125
            %v948 = vmul.f32 %v930, 0.001953125
            %v949 = vmul.f32 %v895, %v895
            %v950 = vmul.f32 %v896, %v896
            %v951 = vmul.f32 %v897, %v897
            %v952 = vmul.f32 %v898, %v898
            %v953 = vmul.f32 %v899, %v899
            %v954 = vmul.f32 %v900, %v900
            %v955 = vmul.f32 %v901, %v901
            %v956 = vmul.f32 %v902, %v902
            %v957 = vmul.f32 %v903, %v903
            %v958 = vmul.f32 %v904, %v904
            %v959 = vmul.f32 %v905, %v905
            %v960 = vmul.f32 %v906, %v906
            %v961 = vmul.f32 %v907, %v907
            %v962 = vmul.f32 %v908, %v908
            %v963 = vmul.f32 %v909, %v909
            %v964 = vmul.f32 %v910, %v910
            %v965 = vmul.f32 %v911, %v911
            %v966 = vmul.f32 %v912, %v912
            %v967 = vsub.f32 %v931, %v949
            %v968 = vsub.f32 %v932, %v950
            %v969 = vsub.f32 %v933, %v951
            %v970 = vsub.f32 %v934, %v952
            %v971 = vsub.f32 %v935, %v953
            %v972 = vsub.f32 %v936, %v954
            %v973 = vsub.f32 %v937, %v955
            %v974 = vsub.f32 %v938, %v956
            %v975 = vsub.f32 %v939, %v957
            %v976 = vsub.f32 %v940, %v958
            %v977 = vsub.f32 %v941, %v959
            %v978 = vsub.f32 %v942, %v960
            %v979 = vsub.f32 %v943, %v961
            %v980 = vsub.f32 %v944, %v962
            %v981 = vsub.f32 %v945, %v963
            %v982 = vsub.f32 %v946, %v964
            %v983 = vsub.f32 %v947, %v965
            %v984 = vsub.f32 %v948, %v966
            %v985 = vmax.f32 %v967, 0.0
            %v986 = vmax.f32 %v968, 0.0
            %v987 = vmax.f32 %v969, 0.0
            %v988 = vmax.f32 %v970, 0.0
            %v989 = vmax.f32 %v971, 0.0
            %v990 = vmax.f32 %v972, 0.0
            %v991 = vmax.f32 %v973, 0.0
            %v992 = vmax.f32 %v974, 0.0
            %v993 = vmax.f32 %v975, 0.0
            %v994 = vmax.f32 %v976, 0.0
            %v995 = vmax.f32 %v977, 0.0
            %v996 = vmax.f32 %v978, 0.0
            %v997 = vmax.f32 %v979, 0.0
            %v998 = vmax.f32 %v980, 0.0
            %v999 = vmax.f32 %v981, 0.0
            %v1000 = vmax.f32 %v982, 0.0
            %v1001 = vmax.f32 %v983, 0.0
            %v1002 = vmax.f32 %v984, 0.0
            %v1003 = vld [vmem:[%s3] sm:$0xff]
            %v1004 = vld [vmem:[%s3 + $0x8] sm:$0xff]
            %v1005 = vld [vmem:[%s3 + $0x10] sm:$0xff]
            %v1006 = vld [vmem:[%s3 + $0x18] sm:$0xff]
            %v1007 = vld [vmem:[%s3 + $0x20] sm:$0xff]
            %v1008 = vld [vmem:[%s3 + $0x28] sm:$0xff]
            %v1009 = vld [vmem:[%s3 + $0x30] sm:$0xff]
            %v1010 = vld [vmem:[%s3 + $0x38] sm:$0xff]
            %v1011 = vld [vmem:[%s3 + $0x40] sm:$0xff]
            %v1012 = vld [vmem:[%s3 + $0x48] sm:$0xff]
            %v1013 = vld [vmem:[%s3 + $0x50] sm:$0xff]
            %v1014 = vld [vmem:[%s3 + $0x58] sm:$0xff]
            %v1015 = vld [vmem:[%s3 + $0x60] sm:$0xff]
            %v1016 = vld [vmem:[%s3 + $0x68] sm:$0xff]
            %v1017 = vld [vmem:[%s3 + $0x70] sm:$0xff]
            %v1018 = vld [vmem:[%s3 + $0x78] sm:$0xff]
            %v1019 = vld [vmem:[%s3 + $0x80] sm:$0xff]
            %v1020 = vld [vmem:[%s3 + $0x88] sm:$0xff]
            %v1021 = vadd.f32 %v985, 0.001
            %v1022 = vadd.f32 %v986, 0.001
            %v1023 = vadd.f32 %v987, 0.001
            %v1024 = vadd.f32 %v988, 0.001
            %v1025 = vadd.f32 %v989, 0.001
            %v1026 = vadd.f32 %v990, 0.001
            %v1027 = vadd.f32 %v991, 0.001
            %v1028 = vadd.f32 %v992, 0.001
            %v1029 = vadd.f32 %v993, 0.001
            %v1030 = vadd.f32 %v994, 0.001
            %v1031 = vadd.f32 %v995, 0.001
            %v1032 = vadd.f32 %v996, 0.001
            %v1033 = vadd.f32 %v997, 0.001
            %v1034 = vadd.f32 %v998, 0.001
            %v1035 = vadd.f32 %v999, 0.001
            %v1036 = vadd.f32 %v1000, 0.001
            %v1037 = vadd.f32 %v1001, 0.001
            %v1038 = vadd.f32 %v1002, 0.001
            %v1039 = vrsqrt.pop %v1021
            %v1040 = vrsqrt.pop %v1022
            %v1041 = vrsqrt.pop %v1023
            %v1042 = vrsqrt.pop %v1024
            %v1043 = vrsqrt.pop %v1025
            %v1044 = vrsqrt.pop %v1026
            %v1045 = vrsqrt.pop %v1027
            %v1046 = vrsqrt.pop %v1028
            %v1047 = vrsqrt.pop %v1029
            %v1048 = vrsqrt.pop %v1030
            %v1049 = vrsqrt.pop %v1031
            %v1050 = vrsqrt.pop %v1032
            %v1051 = vrsqrt.pop %v1033
            %v1052 = vrsqrt.pop %v1034
            %v1053 = vrsqrt.pop %v1035
            %v1054 = vrsqrt.pop %v1036
            %v1055 = vrsqrt.pop %v1037
            %v1056 = vrsqrt.pop %v1038
            %v1057 = vmul.f32 %v1003, %v1039
            %v1058 = vmul.f32 %v1004, %v1040
            %v1059 = vmul.f32 %v1005, %v1041
            %v1060 = vmul.f32 %v1006, %v1042
            %v1061 = vmul.f32 %v1007, %v1043
            %v1062 = vmul.f32 %v1008, %v1044
            %v1063 = vmul.f32 %v1009, %v1045
            %v1064 = vmul.f32 %v1010, %v1046
            %v1065 = vmul.f32 %v1011, %v1047
            %v1066 = vmul.f32 %v1012, %v1048
            %v1067 = vmul.f32 %v1013, %v1049
            %v1068 = vmul.f32 %v1014, %v1050
            %v1069 = vmul.f32 %v1015, %v1051
            %v1070 = vmul.f32 %v1016, %v1052
            %v1071 = vmul.f32 %v1017, %v1053
            %v1072 = vmul.f32 %v1018, %v1054
            %v1073 = vmul.f32 %v1019, %v1055
            %v1074 = vmul.f32 %v1020, %v1056
            %vm1075 = vcmask 7168
            %1076 = vst.msk [vmem:[#allocation4] sm:$0xff] %vm1075, %v1057
            %1077 = vst.msk [vmem:[#allocation4 + $0x8] sm:$0xff] %vm1075, %v1058
            %1078 = vst.msk [vmem:[#allocation4 + $0x10] sm:$0xff] %vm1075, %v1059
            %1079 = vst.msk [vmem:[#allocation4 + $0x18] sm:$0xff] %vm1075, %v1060
            %1080 = vst.msk [vmem:[#allocation4 + $0x20] sm:$0xff] %vm1075, %v1061
            %1081 = vst.msk [vmem:[#allocation4 + $0x28] sm:$0xff] %vm1075, %v1062
            %1082 = vst.msk [vmem:[#allocation4 + $0x30] sm:$0xff] %vm1075, %v1063
            %1083 = vst.msk [vmem:[#allocation4 + $0x38] sm:$0xff] %vm1075, %v1064
            %1084 = vst.msk [vmem:[#allocation4 + $0x40] sm:$0xff] %vm1075, %v1065
            %1085 = vst.msk [vmem:[#allocation4 + $0x48] sm:$0xff] %vm1075, %v1066
            %1086 = vst.msk [vmem:[#allocation4 + $0x50] sm:$0xff] %vm1075, %v1067
            %1087 = vst.msk [vmem:[#allocation4 + $0x58] sm:$0xff] %vm1075, %v1068
            %1088 = vst.msk [vmem:[#allocation4 + $0x60] sm:$0xff] %vm1075, %v1069
            %1089 = vst.msk [vmem:[#allocation4 + $0x68] sm:$0xff] %vm1075, %v1070
            %1090 = vst.msk [vmem:[#allocation4 + $0x70] sm:$0xff] %vm1075, %v1071
            %1091 = vst.msk [vmem:[#allocation4 + $0x78] sm:$0xff] %vm1075, %v1072
            %1092 = vst.msk [vmem:[#allocation4 + $0x80] sm:$0xff] %vm1075, %v1073
            %1093 = vst.msk [vmem:[#allocation4 + $0x88] sm:$0xff] %vm1075, %v1074
            %v1094 = vld [vmem:[%s4] sm:$0xff]
            %v1095 = vld [vmem:[%s4 + $0x8] sm:$0xff]
            %v1096 = vld [vmem:[%s4 + $0x10] sm:$0xff]
            %v1097 = vld [vmem:[%s4 + $0x18] sm:$0xff]
            %v1098 = vld [vmem:[%s4 + $0x20] sm:$0xff]
            %v1099 = vld [vmem:[%s4 + $0x28] sm:$0xff]
            %v1100 = vld [vmem:[%s4 + $0x30] sm:$0xff]
            %v1101 = vld [vmem:[%s4 + $0x38] sm:$0xff]
            %v1102 = vld [vmem:[%s4 + $0x40] sm:$0xff]
            %v1103 = vld [vmem:[%s4 + $0x48] sm:$0xff]
            %v1104 = vld [vmem:[%s4 + $0x50] sm:$0xff]
            %v1105 = vld [vmem:[%s4 + $0x58] sm:$0xff]
            %v1106 = vld [vmem:[%s4 + $0x60] sm:$0xff]
            %v1107 = vld [vmem:[%s4 + $0x68] sm:$0xff]
            %v1108 = vld [vmem:[%s4 + $0x70] sm:$0xff]
            %v1109 = vld [vmem:[%s4 + $0x78] sm:$0xff]
            %v1110 = vld [vmem:[%s4 + $0x80] sm:$0xff]
            %v1111 = vld [vmem:[%s4 + $0x88] sm:$0xff]
            %v1112 = vmul.f32 %v895, %v1057
            %v1113 = vmul.f32 %v896, %v1058
            %v1114 = vmul.f32 %v897, %v1059
            %v1115 = vmul.f32 %v898, %v1060
            %v1116 = vmul.f32 %v899, %v1061
            %v1117 = vmul.f32 %v900, %v1062
            %v1118 = vmul.f32 %v901, %v1063
            %v1119 = vmul.f32 %v902, %v1064
            %v1120 = vmul.f32 %v903, %v1065
            %v1121 = vmul.f32 %v904, %v1066
            %v1122 = vmul.f32 %v905, %v1067
            %v1123 = vmul.f32 %v906, %v1068
            %v1124 = vmul.f32 %v907, %v1069
            %v1125 = vmul.f32 %v908, %v1070
            %v1126 = vmul.f32 %v909, %v1071
            %v1127 = vmul.f32 %v910, %v1072
            %v1128 = vmul.f32 %v911, %v1073
            %v1129 = vmul.f32 %v912, %v1074
            %v1130 = vsub.f32 %v1094, %v1112
            %v1131 = vsub.f32 %v1095, %v1113
            %v1132 = vsub.f32 %v1096, %v1114
            %v1133 = vsub.f32 %v1097, %v1115
            %v1134 = vsub.f32 %v1098, %v1116
            %v1135 = vsub.f32 %v1099, %v1117
            %v1136 = vsub.f32 %v1100, %v1118
            %v1137 = vsub.f32 %v1101, %v1119
            %v1138 = vsub.f32 %v1102, %v1120
            %v1139 = vsub.f32 %v1103, %v1121
            %v1140 = vsub.f32 %v1104, %v1122
            %v1141 = vsub.f32 %v1105, %v1123
            %v1142 = vsub.f32 %v1106, %v1124
            %v1143 = vsub.f32 %v1107, %v1125
            %v1144 = vsub.f32 %v1108, %v1126
            %v1145 = vsub.f32 %v1109, %v1127
            %v1146 = vsub.f32 %v1110, %v1128
            %v1147 = vsub.f32 %v1111, %v1129
            %1148 = vst.msk [vmem:[#allocation5] sm:$0xff] %vm1075, %v1130
            %1149 = vst.msk [vmem:[#allocation5 + $0x8] sm:$0xff] %vm1075, %v1131
            %1150 = vst.msk [vmem:[#allocation5 + $0x10] sm:$0xff] %vm1075, %v1132
            %1151 = vst.msk [vmem:[#allocation5 + $0x18] sm:$0xff] %vm1075, %v1133
            %1152 = vst.msk [vmem:[#allocation5 + $0x20] sm:$0xff] %vm1075, %v1134
            %1153 = vst.msk [vmem:[#allocation5 + $0x28] sm:$0xff] %vm1075, %v1135
            %1154 = vst.msk [vmem:[#allocation5 + $0x30] sm:$0xff] %vm1075, %v1136
            %1155 = vst.msk [vmem:[#allocation5 + $0x38] sm:$0xff] %vm1075, %v1137
            %1156 = vst.msk [vmem:[#allocation5 + $0x40] sm:$0xff] %vm1075, %v1138
            %1157 = vst.msk [vmem:[#allocation5 + $0x48] sm:$0xff] %vm1075, %v1139
            %1158 = vst.msk [vmem:[#allocation5 + $0x50] sm:$0xff] %vm1075, %v1140
            %1159 = vst.msk [vmem:[#allocation5 + $0x58] sm:$0xff] %vm1075, %v1141
            %1160 = vst.msk [vmem:[#allocation5 + $0x60] sm:$0xff] %vm1075, %v1142
            %1161 = vst.msk [vmem:[#allocation5 + $0x68] sm:$0xff] %vm1075, %v1143
            %1162 = vst.msk [vmem:[#allocation5 + $0x70] sm:$0xff] %vm1075, %v1144
            %1163 = vst.msk [vmem:[#allocation5 + $0x78] sm:$0xff] %vm1075, %v1145
            %1164 = vst.msk [vmem:[#allocation5 + $0x80] sm:$0xff] %vm1075, %v1146
            %1165 = vst.msk [vmem:[#allocation5 + $0x88] sm:$0xff] %vm1075, %v1147
          $region56: #{tpu_custom_call.1} parent=51 // pred_fallthru
            _
          %v1166 = vld [vmem:[#allocation4] sm:$0xff]
          %v1167 = vld [vmem:[#allocation4 + $0x8] sm:$0xff]
          %v1168 = vld [vmem:[#allocation4 + $0x10] sm:$0xff]
          %v1169 = vld [vmem:[#allocation4 + $0x18] sm:$0xff]
          %v1170 = vld [vmem:[#allocation4 + $0x20] sm:$0xff]
          %v1171 = vld [vmem:[#allocation4 + $0x28] sm:$0xff]
          %v1172 = vld [vmem:[#allocation4 + $0x30] sm:$0xff]
          %v1173 = vld [vmem:[#allocation4 + $0x38] sm:$0xff]
          %v1174 = vld [vmem:[#allocation4 + $0x40] sm:$0xff]
          %v1175 = vld [vmem:[#allocation4 + $0x48] sm:$0xff]
          %v1176 = vld [vmem:[#allocation4 + $0x50] sm:$0xff]
          %v1177 = vld [vmem:[#allocation4 + $0x58] sm:$0xff]
          %v1178 = vld [vmem:[#allocation4 + $0x60] sm:$0xff]
          %v1179 = vld [vmem:[#allocation4 + $0x68] sm:$0xff]
          %v1180 = vld [vmem:[#allocation4 + $0x70] sm:$0xff]
          %v1181 = vld [vmem:[#allocation4 + $0x78] sm:$0xff]
          %v1182 = vld [vmem:[#allocation4 + $0x80] sm:$0xff]
          %v1183 = vld [vmem:[#allocation4 + $0x88] sm:$0xff]
          %1185 = vset.pattern.permute.xlu0 0
          %1186 = vperm.xlu0 %1185, %v1166
          %v1187 = vpop.permute.xlu0 %1186
          %1190 = vset.pattern.permute.xlu0 0
          %1191 = vperm.xlu0 %1190, %v1167
          %v1192 = vpop.permute.xlu0 %1191
          %1195 = vset.pattern.permute.xlu0 0
          %1196 = vperm.xlu0 %1195, %v1168
          %v1197 = vpop.permute.xlu0 %1196
          %1200 = vset.pattern.permute.xlu0 0
          %1201 = vperm.xlu0 %1200, %v1169
          %v1202 = vpop.permute.xlu0 %1201
          %1205 = vset.pattern.permute.xlu0 0
          %1206 = vperm.xlu0 %1205, %v1170
          %v1207 = vpop.permute.xlu0 %1206
          %1210 = vset.pattern.permute.xlu0 0
          %1211 = vperm.xlu0 %1210, %v1171
          %v1212 = vpop.permute.xlu0 %1211
          %1215 = vset.pattern.permute.xlu0 0
          %1216 = vperm.xlu0 %1215, %v1172
          %v1217 = vpop.permute.xlu0 %1216
          %1220 = vset.pattern.permute.xlu0 0
          %1221 = vperm.xlu0 %1220, %v1173
          %v1222 = vpop.permute.xlu0 %1221
          %1225 = vset.pattern.permute.xlu0 0
          %1226 = vperm.xlu0 %1225, %v1174
          %v1227 = vpop.permute.xlu0 %1226
          %1230 = vset.pattern.permute.xlu0 0
          %1231 = vperm.xlu0 %1230, %v1175
          %v1232 = vpop.permute.xlu0 %1231
          %1235 = vset.pattern.permute.xlu0 0
          %1236 = vperm.xlu0 %1235, %v1176
          %v1237 = vpop.permute.xlu0 %1236
          %1240 = vset.pattern.permute.xlu0 0
          %1241 = vperm.xlu0 %1240, %v1177
          %v1242 = vpop.permute.xlu0 %1241
          %1245 = vset.pattern.permute.xlu0 0
          %1246 = vperm.xlu0 %1245, %v1178
          %v1247 = vpop.permute.xlu0 %1246
          %1250 = vset.pattern.permute.xlu0 0
          %1251 = vperm.xlu0 %1250, %v1179
          %v1252 = vpop.permute.xlu0 %1251
          %1255 = vset.pattern.permute.xlu0 0
          %1256 = vperm.xlu0 %1255, %v1180
          %v1257 = vpop.permute.xlu0 %1256
          %1260 = vset.pattern.permute.xlu0 0
          %1261 = vperm.xlu0 %1260, %v1181
          %v1262 = vpop.permute.xlu0 %1261
          %1265 = vset.pattern.permute.xlu0 0
          %1266 = vperm.xlu0 %1265, %v1182
          %v1267 = vpop.permute.xlu0 %1266
          %1270 = vset.pattern.permute.xlu0 0
          %1271 = vperm.xlu0 %1270, %v1183
          %v1272 = vpop.permute.xlu0 %1271
          %v1274 = vmul.f32 %v461, %v1187
          %v1275 = vmul.f32 %v463, %v1187
          %v1276 = vmul.f32 %v467, %v1192
          %v1277 = vmul.f32 %v469, %v1192
          %v1278 = vmul.f32 %v473, %v1197
          %v1279 = vmul.f32 %v475, %v1197
          %v1280 = vmul.f32 %v479, %v1202
          %v1281 = vmul.f32 %v481, %v1202
          %v1282 = vmul.f32 %v485, %v1207
          %v1283 = vmul.f32 %v487, %v1207
          %v1284 = vmul.f32 %v491, %v1212
          %v1285 = vmul.f32 %v493, %v1212
          %v1286 = vmul.f32 %v497, %v1217
          %v1287 = vmul.f32 %v499, %v1217
          %v1288 = vmul.f32 %v503, %v1222
          %v1289 = vmul.f32 %v505, %v1222
          %v1290 = vmul.f32 %v509, %v1227
          %v1291 = vmul.f32 %v511, %v1227
          %v1292 = vmul.f32 %v515, %v1232
          %v1293 = vmul.f32 %v517, %v1232
          %v1294 = vmul.f32 %v521, %v1237
          %v1295 = vmul.f32 %v523, %v1237
          %v1296 = vmul.f32 %v527, %v1242
          %v1297 = vmul.f32 %v529, %v1242
          %v1298 = vmul.f32 %v533, %v1247
          %v1299 = vmul.f32 %v535, %v1247
          %v1300 = vmul.f32 %v539, %v1252
          %v1301 = vmul.f32 %v541, %v1252
          %v1302 = vmul.f32 %v545, %v1257
          %v1303 = vmul.f32 %v547, %v1257
          %v1304 = vmul.f32 %v551, %v1262
          %v1305 = vmul.f32 %v553, %v1262
          %v1306 = vmul.f32 %v557, %v1267
          %v1307 = vmul.f32 %v559, %v1267
          %v1308 = vmul.f32 %v563, %v1272
          %v1309 = vmul.f32 %v565, %v1272
          %v1310 = vld [vmem:[#allocation5] sm:$0xff]
          %v1311 = vld [vmem:[#allocation5 + $0x8] sm:$0xff]
          %v1312 = vld [vmem:[#allocation5 + $0x10] sm:$0xff]
          %v1313 = vld [vmem:[#allocation5 + $0x18] sm:$0xff]
          %v1314 = vld [vmem:[#allocation5 + $0x20] sm:$0xff]
          %v1315 = vld [vmem:[#allocation5 + $0x28] sm:$0xff]
          %v1316 = vld [vmem:[#allocation5 + $0x30] sm:$0xff]
          %v1317 = vld [vmem:[#allocation5 + $0x38] sm:$0xff]
          %v1318 = vld [vmem:[#allocation5 + $0x40] sm:$0xff]
          %v1319 = vld [vmem:[#allocation5 + $0x48] sm:$0xff]
          %v1320 = vld [vmem:[#allocation5 + $0x50] sm:$0xff]
          %v1321 = vld [vmem:[#allocation5 + $0x58] sm:$0xff]
          %v1322 = vld [vmem:[#allocation5 + $0x60] sm:$0xff]
          %v1323 = vld [vmem:[#allocation5 + $0x68] sm:$0xff]
          %v1324 = vld [vmem:[#allocation5 + $0x70] sm:$0xff]
          %v1325 = vld [vmem:[#allocation5 + $0x78] sm:$0xff]
          %v1326 = vld [vmem:[#allocation5 + $0x80] sm:$0xff]
          %v1327 = vld [vmem:[#allocation5 + $0x88] sm:$0xff]
          %1329 = vset.pattern.permute.xlu0 0
          %1330 = vperm.xlu0 %1329, %v1310
          %v1331 = vpop.permute.xlu0 %1330
          %1334 = vset.pattern.permute.xlu0 0
          %1335 = vperm.xlu0 %1334, %v1311
          %v1336 = vpop.permute.xlu0 %1335
          %1339 = vset.pattern.permute.xlu0 0
          %1340 = vperm.xlu0 %1339, %v1312
          %v1341 = vpop.permute.xlu0 %1340
          %1344 = vset.pattern.permute.xlu0 0
          %1345 = vperm.xlu0 %1344, %v1313
          %v1346 = vpop.permute.xlu0 %1345
          %1349 = vset.pattern.permute.xlu0 0
          %1350 = vperm.xlu0 %1349, %v1314
          %v1351 = vpop.permute.xlu0 %1350
          %1354 = vset.pattern.permute.xlu0 0
          %1355 = vperm.xlu0 %1354, %v1315
          %v1356 = vpop.permute.xlu0 %1355
          %1359 = vset.pattern.permute.xlu0 0
          %1360 = vperm.xlu0 %1359, %v1316
          %v1361 = vpop.permute.xlu0 %1360
          %1364 = vset.pattern.permute.xlu0 0
          %1365 = vperm.xlu0 %1364, %v1317
          %v1366 = vpop.permute.xlu0 %1365
          %1369 = vset.pattern.permute.xlu0 0
          %1370 = vperm.xlu0 %1369, %v1318
          %v1371 = vpop.permute.xlu0 %1370
          %1374 = vset.pattern.permute.xlu0 0
          %1375 = vperm.xlu0 %1374, %v1319
          %v1376 = vpop.permute.xlu0 %1375
          %1379 = vset.pattern.permute.xlu0 0
          %1380 = vperm.xlu0 %1379, %v1320
          %v1381 = vpop.permute.xlu0 %1380
          %1384 = vset.pattern.permute.xlu0 0
          %1385 = vperm.xlu0 %1384, %v1321
          %v1386 = vpop.permute.xlu0 %1385
          %1389 = vset.pattern.permute.xlu0 0
          %1390 = vperm.xlu0 %1389, %v1322
          %v1391 = vpop.permute.xlu0 %1390
          %1394 = vset.pattern.permute.xlu0 0
          %1395 = vperm.xlu0 %1394, %v1323
          %v1396 = vpop.permute.xlu0 %1395
          %1399 = vset.pattern.permute.xlu0 0
          %1400 = vperm.xlu0 %1399, %v1324
          %v1401 = vpop.permute.xlu0 %1400
          %1404 = vset.pattern.permute.xlu0 0
          %1405 = vperm.xlu0 %1404, %v1325
          %v1406 = vpop.permute.xlu0 %1405
          %1409 = vset.pattern.permute.xlu0 0
          %1410 = vperm.xlu0 %1409, %v1326
          %v1411 = vpop.permute.xlu0 %1410
          %1414 = vset.pattern.permute.xlu0 0
          %1415 = vperm.xlu0 %1414, %v1327
          %v1416 = vpop.permute.xlu0 %1415
          %v1418 = vadd.f32 %v1274, %v1331
          %v1419 = vadd.f32 %v1275, %v1331
          %v1420 = vadd.f32 %v1276, %v1336
          %v1421 = vadd.f32 %v1277, %v1336
          %v1422 = vadd.f32 %v1278, %v1341
          %v1423 = vadd.f32 %v1279, %v1341
          %v1424 = vadd.f32 %v1280, %v1346
          %v1425 = vadd.f32 %v1281, %v1346
          %v1426 = vadd.f32 %v1282, %v1351
          %v1427 = vadd.f32 %v1283, %v1351
          %v1428 = vadd.f32 %v1284, %v1356
          %v1429 = vadd.f32 %v1285, %v1356
          %v1430 = vadd.f32 %v1286, %v1361
          %v1431 = vadd.f32 %v1287, %v1361
          %v1432 = vadd.f32 %v1288, %v1366
          %v1433 = vadd.f32 %v1289, %v1366
          %v1434 = vadd.f32 %v1290, %v1371
          %v1435 = vadd.f32 %v1291, %v1371
          %v1436 = vadd.f32 %v1292, %v1376
          %v1437 = vadd.f32 %v1293, %v1376
          %v1438 = vadd.f32 %v1294, %v1381
          %v1439 = vadd.f32 %v1295, %v1381
          %v1440 = vadd.f32 %v1296, %v1386
          %v1441 = vadd.f32 %v1297, %v1386
          %v1442 = vadd.f32 %v1298, %v1391
          %v1443 = vadd.f32 %v1299, %v1391
          %v1444 = vadd.f32 %v1300, %v1396
          %v1445 = vadd.f32 %v1301, %v1396
          %v1446 = vadd.f32 %v1302, %v1401
          %v1447 = vadd.f32 %v1303, %v1401
          %v1448 = vadd.f32 %v1304, %v1406
          %v1449 = vadd.f32 %v1305, %v1406
          %v1450 = vadd.f32 %v1306, %v1411
          %v1451 = vadd.f32 %v1307, %v1411
          %v1452 = vadd.f32 %v1308, %v1416
          %v1453 = vadd.f32 %v1309, %v1416
          %1454 = vst [vmem:[%s279] sm:$0xff] %v1418
          %1455 = vst [vmem:[%s279 + $0x8] sm:$0xff] %v1419
          %1456 = vst [vmem:[%s279 + $0x10] sm:$0xff] %v1420
          %1457 = vst [vmem:[%s279 + $0x18] sm:$0xff] %v1421
          %1458 = vst [vmem:[%s279 + $0x20] sm:$0xff] %v1422
          %1459 = vst [vmem:[%s279 + $0x28] sm:$0xff] %v1423
          %1460 = vst [vmem:[%s279 + $0x30] sm:$0xff] %v1424
          %1461 = vst [vmem:[%s279 + $0x38] sm:$0xff] %v1425
          %1462 = vst [vmem:[%s279 + $0x40] sm:$0xff] %v1426
          %1463 = vst [vmem:[%s279 + $0x48] sm:$0xff] %v1427
          %1464 = vst [vmem:[%s279 + $0x50] sm:$0xff] %v1428
          %1465 = vst [vmem:[%s279 + $0x58] sm:$0xff] %v1429
          %1466 = vst [vmem:[%s279 + $0x60] sm:$0xff] %v1430
          %1467 = vst [vmem:[%s279 + $0x68] sm:$0xff] %v1431
          %1468 = vst [vmem:[%s279 + $0x70] sm:$0xff] %v1432
          %1469 = vst [vmem:[%s279 + $0x78] sm:$0xff] %v1433
          %1470 = vst [vmem:[%s279 + $0x80] sm:$0xff] %v1434
          %1471 = vst [vmem:[%s279 + $0x88] sm:$0xff] %v1435
          %1472 = vst [vmem:[%s279 + $0x90] sm:$0xff] %v1436
          %1473 = vst [vmem:[%s279 + $0x98] sm:$0xff] %v1437
          %1474 = vst [vmem:[%s279 + $0xa0] sm:$0xff] %v1438
          %1475 = vst [vmem:[%s279 + $0xa8] sm:$0xff] %v1439
          %1476 = vst [vmem:[%s279 + $0xb0] sm:$0xff] %v1440
          %1477 = vst [vmem:[%s279 + $0xb8] sm:$0xff] %v1441
          %1478 = vst [vmem:[%s279 + $0xc0] sm:$0xff] %v1442
          %1479 = vst [vmem:[%s279 + $0xc8] sm:$0xff] %v1443
          %1480 = vst [vmem:[%s279 + $0xd0] sm:$0xff] %v1444
          %1481 = vst [vmem:[%s279 + $0xd8] sm:$0xff] %v1445
          %1482 = vst [vmem:[%s279 + $0xe0] sm:$0xff] %v1446
          %1483 = vst [vmem:[%s279 + $0xe8] sm:$0xff] %v1447
          %1484 = vst [vmem:[%s279 + $0xf0] sm:$0xff] %v1448
          %1485 = vst [vmem:[%s279 + $0xf8] sm:$0xff] %v1449
          %1486 = vst [vmem:[%s279 + $0x100] sm:$0xff] %v1450
          %1487 = vst [vmem:[%s279 + $0x108] sm:$0xff] %v1451
          %1488 = vst [vmem:[%s279 + $0x110] sm:$0xff] %v1452
          %1489 = vst [vmem:[%s279 + $0x118] sm:$0xff] %v1453
        $region52: #{tpu_custom_call.1} parent=39 // pred_fallthru
          _
        %s1490 = sand.u32 %s171, 1
        %s1491 = scalar_lea.sflag [#allocation7], %s1490
        %s1492 = sand.u32 %s171, 1
        %s1493 = smul.addr %s1492, 288
        %s1494 = scalar_lea.vmem [#allocation6], %s1493
        // Predicated region
        $region57: #{tpu_custom_call.1} parent=39 // pred_check
          %p1495 = pneg %p181
        $region58: #{tpu_custom_call.1} parent=39 // pred_check_branch
          %1497 = sbr.rel (%p1495) target = $region60
        $region59: #{tpu_custom_call.1} parent=39 // pred_region
          %s1498 = smul.u32 %s25, %s24
          %s1499 = smul.u32 %s26, %s24
          %s1500 = smul.u32 2, %s1499
          %s1502 = ssub.s32 4608, 4608
          %1503 = vsyncadd %s1491, %s1502
          %s1504 = smul.addr %s1498, 36
          %s1505 = sadd.s32 %s1500, %s1504
          %s1506 = smul.addr %s1505, 128
          %s1507 = scalar_lea.hbm %s5, %s1506
          %s1508 = sshll.u32 %s1494, 4
          %s1509 = int_to_ptr.vmem [resolvable:$true] %s1508
          %1514 = dma.vmem_to_hbm [thread:$0]  %s1509, 4608, %s1507, %s1491, 256, 256, 16
        $region60: #{tpu_custom_call.1} parent=39 // pred_fallthru
          _
      $region40: #{tpu_custom_call.1} parent=5 // pred_fallthru
        _
      %p1515 = scmp.le.s32.totalorder 2, %s14
      // Predicated region
      $region61: #{tpu_custom_call.1} parent=5 // pred_check
        %p1516 = pneg %p1515
      $region62: #{tpu_custom_call.1} parent=5 // pred_check_branch
        %1518 = sbr.rel (%p1516) target = $region64
      $region63: #{tpu_custom_call.1} parent=5 // pred_region
        %s1519 = ssub.s32 %s14, 2
        // Predicated region
        $region65: #{tpu_custom_call.1} parent=63 // pred_check
          %p1520 = pneg %p187
        $region66: #{tpu_custom_call.1} parent=63 // pred_check_branch
          %1522 = sbr.rel (%p1520) target = $region68
        $region67: #{tpu_custom_call.1} parent=63 // pred_region
          %s1523 = sand.u32 %s172, 1
          %s1524 = scalar_lea.sflag [#allocation7], %s1523
          %s1525 = sand.u32 %s172, 1
          %s1526 = smul.addr %s1525, 288
          %s1527 = scalar_lea.vmem [#allocation6], %s1526
          %1528 = dma.done %s1524, 4608
        $region68: #{tpu_custom_call.1} parent=63 // pred_fallthru
          _
      $region64: #{tpu_custom_call.1} parent=5 // pred_fallthru
        _
    $region6: #{tpu_custom_call.1} parent=1 // loop_footer
      %s18 = sadd.s32 1, %s14
    $region7: #{tpu_custom_call.1} parent=1 // loop_footer_branch
      %13 = sbr.rel target = $region3
    $region8: #{tpu_custom_call.1} parent=1 // loop_exit
      _
    %1529 = vsyncpa [#allocation7], 1
    %s1530 = scalar_lea.sflag [#allocation7], 1
    %1531 = vsyncpa %s1530, 1

</llo_original>
